<compile_context>
chip_gen: v7x
topology: tpu7x:2x2x1
jax: 0.10.0
libtpu: 0.0.40
codegen_flags: <defaults>
</compile_context>

<pallas_src>
import functools
import math

import jax
import jax.numpy as jnp
from jax.experimental import pallas as pl
from jax.experimental.pallas import tpu as pltpu

NEG_INF = float(jnp.finfo(jnp.float32).min)
LN_EPS = 1e-12                      # DistilBERT layer-norm eps
VMEM_LIMIT = 48 * 1024 * 1024       # headroom under v7x's 64 MiB physical VMEM


def _pick_tile(dim, candidates):
    """Largest candidate tile that divides `dim`; fall back to the full extent
    (a block equal to the array dim always satisfies the (8,128) rule)."""
    for c in candidates:
        if c <= dim and dim % c == 0:
            return c
    return dim


def _gelu(y):
    # TODO(synk): HF DistilBERT uses exact erf-GELU; tanh approximation kept
    # since erf is not guaranteed to lower in Mosaic.
    return 0.5 * y * (1.0 + jnp.tanh(0.7978845608028654 * (y + 0.044715 * y * y * y)))


def _layernorm_f32(y, g_ref, b_ref, eps):
    mu = jnp.mean(y, axis=-1, keepdims=True)
    var = jnp.mean(jnp.square(y - mu), axis=-1, keepdims=True)
    yn = (y - mu) * jax.lax.rsqrt(var + eps)
    return yn * g_ref[...].astype(jnp.float32) + b_ref[...].astype(jnp.float32)


# ----------------------------- Pallas kernels ------------------------------ #

def _linear_kernel(x_ref, w_ref, b_ref, o_ref, acc_ref, *, activation):
    k = pl.program_id(2)

    @pl.when(k == 0)
    def _():
        acc_ref[...] = jnp.zeros_like(acc_ref)

    acc_ref[...] += jnp.dot(x_ref[...], w_ref[...], preferred_element_type=jnp.float32)

    @pl.when(k == pl.num_programs(2) - 1)
    def _():
        y = acc_ref[...] + b_ref[...].astype(jnp.float32)
        if activation == "gelu":
            y = _gelu(y)
        elif activation == "sigmoid":
            y = jax.nn.sigmoid(y)
        o_ref[...] = y.astype(o_ref.dtype)


def linear(x, w, b, activation=None, out_dtype=jnp.bfloat16):
    """y = x @ w + b with optional fused activation.  x:(M,K) bf16, w:(K,N) bf16, b:(N,) f32."""
    m, kdim = x.shape
    n = w.shape[1]
    tm = _pick_tile(m, (256, 128, 64, 32, 16, 8))
    tn = _pick_tile(n, (512, 256, 128))
    tk = _pick_tile(kdim, (512, 256, 128))
    grid = (m // tm, n // tn, kdim // tk)
    return pl.pallas_call(
        functools.partial(_linear_kernel, activation=activation),
        grid=grid,
        in_specs=[
            pl.BlockSpec((tm, tk), lambda i, j, k: (i, k)),
            pl.BlockSpec((tk, tn), lambda i, j, k: (k, j)),
            pl.BlockSpec((1, tn), lambda i, j, k: (0, j)),
        ],
        out_specs=pl.BlockSpec((tm, tn), lambda i, j, k: (i, j)),
        out_shape=jax.ShapeDtypeStruct((m, n), out_dtype),
        scratch_shapes=[pltpu.VMEM((tm, tn), jnp.float32)],
        compiler_params=pltpu.CompilerParams(
            dimension_semantics=("parallel", "parallel", "arbitrary"),
            vmem_limit_bytes=VMEM_LIMIT),
    )(x, w, b.reshape(1, n))


def _linear_add_ln_kernel(x_ref, w_ref, b_ref, r_ref, g_ref, bt_ref, o_ref, acc_ref, *, eps):
    k = pl.program_id(1)

    @pl.when(k == 0)
    def _():
        acc_ref[...] = jnp.zeros_like(acc_ref)

    acc_ref[...] += jnp.dot(x_ref[...], w_ref[...], preferred_element_type=jnp.float32)

    @pl.when(k == pl.num_programs(1) - 1)
    def _():
        y = (acc_ref[...] + b_ref[...].astype(jnp.float32)
             + r_ref[...].astype(jnp.float32))
        o_ref[...] = _layernorm_f32(y, g_ref, bt_ref, eps).astype(o_ref.dtype)


def linear_add_layernorm(x, w, b, residual, gamma, beta, out_dtype=jnp.bfloat16):
    """LayerNorm(x @ w + b + residual) fused in one kernel.
    x:(M,K), w:(K,D), residual:(M,D).  Output tile is the full D row so the LN
    reduction happens on-chip; the pre-LN activation never hits HBM."""
    m, kdim = x.shape
    d = w.shape[1]
    tm = _pick_tile(m, (256, 128, 64, 32, 16, 8))
    tk = _pick_tile(kdim, (512, 256, 128))
    grid = (m // tm, kdim // tk)
    return pl.pallas_call(
        functools.partial(_linear_add_ln_kernel, eps=LN_EPS),
        grid=grid,
        in_specs=[
            pl.BlockSpec((tm, tk), lambda i, k: (i, k)),
            pl.BlockSpec((tk, d), lambda i, k: (k, 0)),
            pl.BlockSpec((1, d), lambda i, k: (0, 0)),
            pl.BlockSpec((tm, d), lambda i, k: (i, 0)),
            pl.BlockSpec((1, d), lambda i, k: (0, 0)),
            pl.BlockSpec((1, d), lambda i, k: (0, 0)),
        ],
        out_specs=pl.BlockSpec((tm, d), lambda i, k: (i, 0)),
        out_shape=jax.ShapeDtypeStruct((m, d), out_dtype),
        scratch_shapes=[pltpu.VMEM((tm, d), jnp.float32)],
        compiler_params=pltpu.CompilerParams(
            dimension_semantics=("parallel", "arbitrary"),
            vmem_limit_bytes=VMEM_LIMIT),
    )(x, w, b.reshape(1, d), residual, gamma.reshape(1, d), beta.reshape(1, d))


def _ffn_add_ln_kernel(x_ref, w1_ref, b1_ref, w2_ref, b2_ref, g_ref, bt_ref,
                       o_ref, acc_ref, *, eps):
    h = pl.program_id(1)

    @pl.when(h == 0)
    def _():
        acc_ref[...] = jnp.zeros_like(acc_ref)

    t = jnp.dot(x_ref[...], w1_ref[...], preferred_element_type=jnp.float32)
    t = _gelu(t + b1_ref[...].astype(jnp.float32))
    acc_ref[...] += jnp.dot(t.astype(jnp.bfloat16), w2_ref[...],
                            preferred_element_type=jnp.float32)

    @pl.when(h == pl.num_programs(1) - 1)
    def _():
        # residual is the FFN input block itself (VMEM-resident across h).
        y = (acc_ref[...] + b2_ref[...].astype(jnp.float32)
             + x_ref[...].astype(jnp.float32))
        o_ref[...] = _layernorm_f32(y, g_ref, bt_ref, eps).astype(o_ref.dtype)


def ffn_add_layernorm(x, w1, b1, w2, b2, gamma, beta, out_dtype=jnp.bfloat16):
    """LayerNorm(GELU(x @ w1 + b1) @ w2 + b2 + x); hidden dim tiled as an
    in-kernel reduction so the (M, hidden) intermediate and pre-LN output
    never hit HBM."""
    m, d = x.shape
    hdim = w1.shape[1]
    tm = _pick_tile(m, (256, 128, 64, 32, 16, 8))
    th = _pick_tile(hdim, (512, 256, 128))
    grid = (m // tm, hdim // th)
    return pl.pallas_call(
        functools.partial(_ffn_add_ln_kernel, eps=LN_EPS),
        grid=grid,
        in_specs=[
            pl.BlockSpec((tm, d), lambda i, j: (i, 0)),
            pl.BlockSpec((d, th), lambda i, j: (0, j)),
            pl.BlockSpec((1, th), lambda i, j: (0, j)),
            pl.BlockSpec((th, d), lambda i, j: (j, 0)),
            pl.BlockSpec((1, d), lambda i, j: (0, 0)),
            pl.BlockSpec((1, d), lambda i, j: (0, 0)),
            pl.BlockSpec((1, d), lambda i, j: (0, 0)),
        ],
        out_specs=pl.BlockSpec((tm, d), lambda i, j: (i, 0)),
        out_shape=jax.ShapeDtypeStruct((m, d), out_dtype),
        scratch_shapes=[pltpu.VMEM((tm, d), jnp.float32)],
        compiler_params=pltpu.CompilerParams(
            dimension_semantics=("parallel", "arbitrary"),
            vmem_limit_bytes=VMEM_LIMIT),
    )(x, w1, b1.reshape(1, hdim), w2, b2.reshape(1, d),
      gamma.reshape(1, d), beta.reshape(1, d))


def _add_layernorm_kernel(x_ref, r_ref, g_ref, b_ref, o_ref, *, eps):
    x = x_ref[...].astype(jnp.float32) + r_ref[...].astype(jnp.float32)
    o_ref[...] = _layernorm_f32(x, g_ref, b_ref, eps).astype(o_ref.dtype)


def add_layernorm(x, residual, gamma, beta, out_dtype=jnp.bfloat16):
    """LayerNorm(x + residual) over last dim, tiled over M (embeddings only)."""
    m, d = x.shape
    tm = _pick_tile(m, (256, 128, 64, 32, 16, 8))
    grid = (m // tm,)
    return pl.pallas_call(
        functools.partial(_add_layernorm_kernel, eps=LN_EPS),
        grid=grid,
        in_specs=[
            pl.BlockSpec((tm, d), lambda i: (i, 0)),
            pl.BlockSpec((tm, d), lambda i: (i, 0)),
            pl.BlockSpec((1, d), lambda i: (0, 0)),
            pl.BlockSpec((1, d), lambda i: (0, 0)),
        ],
        out_specs=pl.BlockSpec((tm, d), lambda i: (i, 0)),
        out_shape=jax.ShapeDtypeStruct((m, d), out_dtype),
        compiler_params=pltpu.CompilerParams(
            dimension_semantics=("parallel",),
            vmem_limit_bytes=VMEM_LIMIT),
    )(x, residual, gamma.reshape(1, d), beta.reshape(1, d))


def _attention_kernel(q_ref, k_ref, v_ref, m_ref, o_ref, *, scale):
    # blocks: q/k/v/o = (1, 1, S, Dh) bf16, mask = (1, 1, S) f32
    q = q_ref[0, 0]                                    # (S, Dh) bf16
    k = k_ref[0, 0]                                    # (S, Dh) bf16
    v = v_ref[0, 0]                                    # (S, Dh) bf16
    scores = jax.lax.dot_general(                      # q @ k^T without materializing k.T
        q, k, (((1,), (1,)), ((), ())),
        preferred_element_type=jnp.float32) * scale    # (S, S) f32
    mask = m_ref[0]                                    # (1, S)
    # masked_fill(attention_mask == 0, finfo.min), like HF DistilBERT
    scores = jnp.where(mask == 0.0, NEG_INF, scores)
    row_max = jnp.max(scores, axis=-1, keepdims=True)
    p = jnp.exp(scores - row_max)
    denom = jnp.sum(p, axis=-1, keepdims=True)
    w = p * pl.reciprocal(denom, approx=True)          # EUP reciprocal
    ctx = jnp.dot(w.astype(jnp.bfloat16), v, preferred_element_type=jnp.float32)
    o_ref[...] = ctx[None, None].astype(o_ref.dtype)


def multi_head_attention_core(q, k, v, mask_f):
    """q,k,v: (B, H, S, Dh) bf16; mask_f: (B, 1, S) float {0,1}. Returns (B, H, S, Dh) bf16."""
    b, h, s, dh = q.shape
    qkv_spec = pl.BlockSpec((1, 1, s, dh), lambda i, j: (i, j, 0, 0))
    mspec = pl.BlockSpec((1, 1, s), lambda i, j: (i, 0, 0))
    return pl.pallas_call(
        functools.partial(_attention_kernel, scale=1.0 / math.sqrt(dh)),
        grid=(b, h),
        in_specs=[qkv_spec, qkv_spec, qkv_spec, mspec],
        out_specs=qkv_spec,
        out_shape=jax.ShapeDtypeStruct((b, h, s, dh), jnp.bfloat16),
        compiler_params=pltpu.CompilerParams(
            dimension_semantics=("parallel", "parallel"),
            vmem_limit_bytes=VMEM_LIMIT),
    )(q, k, v, mask_f)


# ----------------------------- model assembly ------------------------------ #

def transformer_block(x, mask_f, p, n_heads):
    b, s, d = x.shape
    dh = d // n_heads
    xf = x.reshape(b * s, d)

    # Fused QKV projection: one HBM read of x instead of three.
    qkv = linear(xf, p["qkv_w"], p["qkv_b"])                     # (B*S, 3D) bf16
    qkv = qkv.reshape(b, s, 3, n_heads, dh)
    # TODO(synk): head-split transposes stay in JAX glue; folding them into the
    # attention index_map would need a trailing (1, Dh) block, which violates
    # the (8,128) tiling rule for DistilBERT's Dh=64.
    q = qkv[:, :, 0].transpose(0, 2, 1, 3)                       # (B, H, S, Dh)
    k = qkv[:, :, 1].transpose(0, 2, 1, 3)
    v = qkv[:, :, 2].transpose(0, 2, 1, 3)

    ctx = multi_head_attention_core(q, k, v, mask_f)             # (B, H, S, Dh)
    ctx = ctx.transpose(0, 2, 1, 3).reshape(b * s, d)

    # o-projection + residual + LayerNorm fused (post-LN, residual = block input)
    sa = linear_add_layernorm(ctx, p["o_w"], p["o_b"], xf, p["ln1_g"], p["ln1_b"])

    # FF1 + GELU + FF2 + residual + LayerNorm fused
    out = ffn_add_layernorm(sa, p["ff1_w"], p["ff1_b"], p["ff2_w"], p["ff2_b"],
                            p["ln2_g"], p["ln2_b"])
    return out.reshape(b, s, d)


def distilbert_forward(params, input_idxs, atten_masks, *, n_heads):
    b, s = input_idxs.shape
    d = params["word_emb"].shape[1]

    # embeddings: word + position, then LayerNorm (gather is glue JAX)
    word = params["word_emb"][input_idxs].reshape(b * s, d)
    pos = jnp.broadcast_to(params["pos_emb"][:s][None], (b, s, d)).reshape(b * s, d)
    x = add_layernorm(word, pos, params["emb_ln_g"], params["emb_ln_b"]).reshape(b, s, d)

    mask_f = atten_masks.astype(jnp.float32).reshape(b, 1, s)
    for layer_p in params["layers"]:
        x = transformer_block(x, mask_f, layer_p, n_heads)

    cls = x[:, 0]                                                # CLS token (B, D)
    # TODO(synk): layers.DistilBERTClassifier internals unknown; assumed
    # dropout (identity at eval) + single Linear(hidden_size, num_labels).
    n_labels = params["cls_w"].shape[1]
    n_pad = ((n_labels + 127) // 128) * 128                      # lane-dense output tile
    w_pad = jnp.pad(params["cls_w"], ((0, 0), (0, n_pad - n_labels)))
    b_pad = jnp.pad(params["cls_b"], (0, n_pad - n_labels))
    log = linear(cls, w_pad, b_pad, activation="sigmoid", out_dtype=jnp.float32)
    return log[:, :n_labels]


# ----------------------------- parameter init ------------------------------ #

def init_params(key, *, vocab, max_pos, dim, n_heads, hidden_dim, n_layers, num_labels):
    keys = iter(jax.random.split(key, 8 + 8 * n_layers))

    def dense(shape):
        # weights stored bf16 (MXU-native); biases / LN params stay f32
        return (0.02 * jax.random.normal(next(keys), shape)).astype(jnp.bfloat16)

    params = {
        "word_emb": dense((vocab, dim)),
        "pos_emb": dense((max_pos, dim)),
        "emb_ln_g": jnp.ones((dim,), jnp.float32),
        "emb_ln_b": jnp.zeros((dim,), jnp.float32),
        "cls_w": dense((dim, num_labels)),
        "cls_b": jnp.zeros((num_labels,), jnp.float32),
        "layers": [],
    }
    for _ in range(n_layers):
        params["layers"].append({
            "qkv_w": dense((dim, 3 * dim)), "qkv_b": jnp.zeros((3 * dim,), jnp.float32),
            "o_w": dense((dim, dim)), "o_b": jnp.zeros((dim,), jnp.float32),
            "ln1_g": jnp.ones((dim,), jnp.float32), "ln1_b": jnp.zeros((dim,), jnp.float32),
            "ff1_w": dense((dim, hidden_dim)), "ff1_b": jnp.zeros((hidden_dim,), jnp.float32),
            "ff2_w": dense((hidden_dim, dim)), "ff2_b": jnp.zeros((dim,), jnp.float32),
            "ln2_g": jnp.ones((dim,), jnp.float32), "ln2_b": jnp.zeros((dim,), jnp.float32),
        })
    return params


# --------------------------------- main ------------------------------------ #

if __name__ == "__main__":
    # Small DistilBERT-shaped config (real model: dim=768, heads=12, layers=6,
    # hidden=3072, vocab=119547 — scaled down for a synthetic kernel test).
    VOCAB, MAX_POS = 1000, 64
    DIM, N_HEADS, HIDDEN, N_LAYERS = 32, 4, 64, 2
    NUM_LABELS = 3
    B, S = 2, 8

    key = jax.random.PRNGKey(0)
    k_param, k_ids = jax.random.split(key)

    params = init_params(
        k_param, vocab=VOCAB, max_pos=MAX_POS, dim=DIM, n_heads=N_HEADS,
        hidden_dim=HIDDEN, n_layers=N_LAYERS, num_labels=NUM_LABELS)

    input_idxs = jax.random.randint(k_ids, (B, S), 0, VOCAB, dtype=jnp.int32)
    atten_masks = jnp.array([[1, 1, 1, 1, 1, 1, 1, 1],
                             [1, 1, 1, 1, 1, 0, 0, 0]], dtype=jnp.int32)

    fwd = jax.jit(functools.partial(distilbert_forward, n_heads=N_HEADS))
    out = fwd(params, input_idxs, atten_masks)
    out = jax.block_until_ready(out)

    assert out.shape == (B, NUM_LABELS), out.shape
    assert bool(jnp.all(jnp.isfinite(out)))
    assert bool(jnp.all((out >= 0.0) & (out <= 1.0)))  # sigmoid output
    print("KERNEL_OK")
</pallas_src>

<mosaic_0001>
module attributes {stable_mosaic.version = 11 : i64} {
  func.func @_linear_kernel(%arg0: i32, %arg1: i32, %arg2: i32, %arg3: memref<16x32xbf16, #tpu.memory_space<vmem>>, %arg4: memref<32x96xbf16, #tpu.memory_space<vmem>>, %arg5: memref<1x96xf32, #tpu.memory_space<vmem>>, %arg6: memref<16x96xbf16, #tpu.memory_space<vmem>>, %arg7: memref<16x96xf32, #tpu.memory_space<vmem>>) attributes {dimension_semantics = [#tpu.dimension_semantics<parallel>, #tpu.dimension_semantics<parallel>, #tpu.dimension_semantics<arbitrary>], iteration_bounds = array<i64: 1, 1, 1>, scalar_prefetch = 0 : i64, scratch_operands = 1 : i64, tpu.core_type = #tpu.core_type<tc>, window_params = [{transform_indices = @transform_0, window_bounds = array<i64: 16, 32>}, {transform_indices = @transform_1, window_bounds = array<i64: 32, 96>}, {transform_indices = @transform_2, window_bounds = array<i64: 1, 96>}, {transform_indices = @transform_3, window_bounds = array<i64: 16, 96>}]} {
    %c0_i32 = arith.constant 0 : i32
    %0 = arith.cmpi eq, %arg2, %c0_i32 : i32
    %1 = arith.extui %0 : i1 to i32
    %c0_i32_0 = arith.constant 0 : i32
    %2 = arith.cmpi ne, %1, %c0_i32_0 : i32
    scf.if %2 {
      %cst_10 = arith.constant 0.000000e+00 : f32
      %12 = vector.broadcast %cst_10 : f32 to vector<16x96xf32>
      %c0_11 = arith.constant 0 : index
      %c0_12 = arith.constant 0 : index
      %13 = vector.load %arg7[%c0_11, %c0_12] : memref<16x96xf32, #tpu.memory_space<vmem>>, vector<16x96xf32>
      tpu.vector_store %arg7[%c0_11, %c0_12], %12 {strides = array<i32>} : memref<16x96xf32, #tpu.memory_space<vmem>>, vector<16x96xf32>,
    } else {
    }
    %c0 = arith.constant 0 : index
    %c0_1 = arith.constant 0 : index
    %3 = vector.load %arg7[%c0, %c0_1] : memref<16x96xf32, #tpu.memory_space<vmem>>, vector<16x96xf32>
    %c0_2 = arith.constant 0 : index
    %c0_3 = arith.constant 0 : index
    %4 = vector.load %arg3[%c0_2, %c0_3] : memref<16x32xbf16, #tpu.memory_space<vmem>>, vector<16x32xbf16>
    %c0_4 = arith.constant 0 : index
    %c0_5 = arith.constant 0 : index
    %5 = vector.load %arg4[%c0_4, %c0_5] : memref<32x96xbf16, #tpu.memory_space<vmem>>, vector<32x96xbf16>
    %cst = arith.constant dense<0.000000e+00> : vector<16x96xf32>
    %6 = tpu.matmul %4, %5, %cst {dimension_numbers = #tpu.dot_dimension_numbers<[1], [0], [0], [1], [0, 0, 1, 1], [], []>} : vector<16x32xbf16>, vector<32x96xbf16>, vector<16x96xf32> -> vector<16x96xf32>
    %7 = arith.addf %3, %6 : vector<16x96xf32>
    %c0_6 = arith.constant 0 : index
    %c0_7 = arith.constant 0 : index
    %8 = vector.load %arg7[%c0_6, %c0_7] : memref<16x96xf32, #tpu.memory_space<vmem>>, vector<16x96xf32>
    tpu.vector_store %arg7[%c0_6, %c0_7], %7 {strides = array<i32>} : memref<16x96xf32, #tpu.memory_space<vmem>>, vector<16x96xf32>,
    %c0_i32_8 = arith.constant 0 : i32
    %9 = arith.cmpi eq, %arg2, %c0_i32_8 : i32
    %10 = arith.extui %9 : i1 to i32
    %c0_i32_9 = arith.constant 0 : i32
    %11 = arith.cmpi ne, %10, %c0_i32_9 : i32
    scf.if %11 {
      %c0_10 = arith.constant 0 : index
      %c0_11 = arith.constant 0 : index
      %12 = vector.load %arg7[%c0_10, %c0_11] : memref<16x96xf32, #tpu.memory_space<vmem>>, vector<16x96xf32>
      %c0_12 = arith.constant 0 : index
      %c0_13 = arith.constant 0 : index
      %13 = vector.load %arg5[%c0_12, %c0_13] : memref<1x96xf32, #tpu.memory_space<vmem>>, vector<1x96xf32>
      %14 = vector.broadcast %13 : vector<1x96xf32> to vector<16x96xf32>
      %15 = arith.addf %12, %14 : vector<16x96xf32>
      %16 = arith.truncf %15 : vector<16x96xf32> to vector<16x96xbf16>
      %c0_14 = arith.constant 0 : index
      %c0_15 = arith.constant 0 : index
      %17 = vector.load %arg6[%c0_14, %c0_15] : memref<16x96xbf16, #tpu.memory_space<vmem>>, vector<16x96xbf16>
      tpu.vector_store %arg6[%c0_14, %c0_15], %16 {strides = array<i32>} : memref<16x96xbf16, #tpu.memory_space<vmem>>, vector<16x96xbf16>,
    } else {
    }
    return
  }
  func.func @transform_0(%arg0: i32, %arg1: i32, %arg2: i32) -> (i32, i32) {
    %c0_i32 = arith.constant 0 : i32
    return %arg0, %arg2 : i32, i32
  }
  func.func @transform_1(%arg0: i32, %arg1: i32, %arg2: i32) -> (i32, i32) {
    %c0_i32 = arith.constant 0 : i32
    return %arg2, %arg1 : i32, i32
  }
  func.func @transform_2(%arg0: i32, %arg1: i32, %arg2: i32) -> (i32, i32) {
    %c0_i32 = arith.constant 0 : i32
    %c0_i32_0 = arith.constant 0 : i32
    return %c0_i32, %arg1 : i32, i32
  }
  func.func @transform_3(%arg0: i32, %arg1: i32, %arg2: i32) -> (i32, i32) {
    %c0_i32 = arith.constant 0 : i32
    return %arg0, %arg1 : i32, i32
  }
}

module attributes {stable_mosaic.version = 11 : i64} {
  func.func @_add_layernorm_kernel(%arg0: i32, %arg1: memref<16x32xbf16, #tpu.memory_space<vmem>>, %arg2: memref<16x32xbf16, #tpu.memory_space<vmem>>, %arg3: memref<1x32xf32, #tpu.memory_space<vmem>>, %arg4: memref<1x32xf32, #tpu.memory_space<vmem>>, %arg5: memref<16x32xbf16, #tpu.memory_space<vmem>>) attributes {dimension_semantics = [#tpu.dimension_semantics<parallel>], iteration_bounds = array<i64: 1>, scalar_prefetch = 0 : i64, scratch_operands = 0 : i64, tpu.core_type = #tpu.core_type<tc>, window_params = [{transform_indices = @transform_0, window_bounds = array<i64: 16, 32>}, {transform_indices = @transform_1, window_bounds = array<i64: 16, 32>}, {pipeline_mode = #tpu.pipeline_mode<synchronous>, transform_indices = @transform_2, window_bounds = array<i64: 1, 32>}, {pipeline_mode = #tpu.pipeline_mode<synchronous>, transform_indices = @transform_3, window_bounds = array<i64: 1, 32>}, {transform_indices = @transform_4, window_bounds = array<i64: 16, 32>}]} {
    %c0 = arith.constant 0 : index
    %c0_0 = arith.constant 0 : index
    %0 = vector.load %arg1[%c0, %c0_0] : memref<16x32xbf16, #tpu.memory_space<vmem>>, vector<16x32xbf16>
    %1 = arith.extf %0 : vector<16x32xbf16> to vector<16x32xf32>
    %c0_1 = arith.constant 0 : index
    %c0_2 = arith.constant 0 : index
    %2 = vector.load %arg2[%c0_1, %c0_2] : memref<16x32xbf16, #tpu.memory_space<vmem>>, vector<16x32xbf16>
    %3 = arith.extf %2 : vector<16x32xbf16> to vector<16x32xf32>
    %4 = arith.addf %1, %3 : vector<16x32xf32>
    %cst = arith.constant dense<0.000000e+00> : vector<16xf32>
    %5 = vector.multi_reduction <add>, %4, %cst [1] : vector<16x32xf32> to vector<16xf32>
    %6 = vector.shape_cast %5 : vector<16xf32> to vector<16x1xf32>
    %cst_3 = arith.constant 3.200000e+01 : f32
    %7 = vector.broadcast %cst_3 : f32 to vector<16x1xf32>
    %8 = arith.divf %6, %7 : vector<16x1xf32>
    %9 = vector.broadcast %8 : vector<16x1xf32> to vector<16x32xf32>
    %10 = arith.subf %4, %9 : vector<16x32xf32>
    %11 = arith.mulf %10, %10 : vector<16x32xf32>
    %cst_4 = arith.constant dense<0.000000e+00> : vector<16xf32>
    %12 = vector.multi_reduction <add>, %11, %cst_4 [1] : vector<16x32xf32> to vector<16xf32>
    %13 = vector.shape_cast %12 : vector<16xf32> to vector<16x1xf32>
    %cst_5 = arith.constant 3.200000e+01 : f32
    %14 = vector.broadcast %cst_5 : f32 to vector<16x1xf32>
    %15 = arith.divf %13, %14 : vector<16x1xf32>
    %16 = vector.broadcast %8 : vector<16x1xf32> to vector<16x32xf32>
    %17 = arith.subf %4, %16 : vector<16x32xf32>
    %cst_6 = arith.constant 9.99999996E-13 : f32
    %18 = vector.broadcast %cst_6 : f32 to vector<16x1xf32>
    %19 = arith.addf %15, %18 : vector<16x1xf32>
    %20 = math.rsqrt %19 : vector<16x1xf32>
    %21 = vector.broadcast %20 : vector<16x1xf32> to vector<16x32xf32>
    %22 = arith.mulf %17, %21 : vector<16x32xf32>
    %c0_7 = arith.constant 0 : index
    %c0_8 = arith.constant 0 : index
    %23 = vector.load %arg3[%c0_7, %c0_8] : memref<1x32xf32, #tpu.memory_space<vmem>>, vector<1x32xf32>
    %24 = vector.broadcast %23 : vector<1x32xf32> to vector<16x32xf32>
    %25 = arith.mulf %22, %24 : vector<16x32xf32>
    %c0_9 = arith.constant 0 : index
    %c0_10 = arith.constant 0 : index
    %26 = vector.load %arg4[%c0_9, %c0_10] : memref<1x32xf32, #tpu.memory_space<vmem>>, vector<1x32xf32>
    %27 = vector.broadcast %26 : vector<1x32xf32> to vector<16x32xf32>
    %28 = arith.addf %25, %27 : vector<16x32xf32>
    %29 = arith.truncf %28 : vector<16x32xf32> to vector<16x32xbf16>
    %c0_11 = arith.constant 0 : index
    %c0_12 = arith.constant 0 : index
    %30 = vector.load %arg5[%c0_11, %c0_12] : memref<16x32xbf16, #tpu.memory_space<vmem>>, vector<16x32xbf16>
    tpu.vector_store %arg5[%c0_11, %c0_12], %29 {strides = array<i32>} : memref<16x32xbf16, #tpu.memory_space<vmem>>, vector<16x32xbf16>,
    return
  }
  func.func @transform_0(%arg0: i32) -> (i32, i32) {
    %c0_i32 = arith.constant 0 : i32
    %c0_i32_0 = arith.constant 0 : i32
    return %arg0, %c0_i32 : i32, i32
  }
  func.func @transform_1(%arg0: i32) -> (i32, i32) {
    %c0_i32 = arith.constant 0 : i32
    %c0_i32_0 = arith.constant 0 : i32
    return %arg0, %c0_i32 : i32, i32
  }
  func.func @transform_2(%arg0: i32) -> (i32, i32) {
    %c0_i32 = arith.constant 0 : i32
    %c0_i32_0 = arith.constant 0 : i32
    %c0_i32_1 = arith.constant 0 : i32
    return %c0_i32, %c0_i32_0 : i32, i32
  }
  func.func @transform_3(%arg0: i32) -> (i32, i32) {
    %c0_i32 = arith.constant 0 : i32
    %c0_i32_0 = arith.constant 0 : i32
    %c0_i32_1 = arith.constant 0 : i32
    return %c0_i32, %c0_i32_0 : i32, i32
  }
  func.func @transform_4(%arg0: i32) -> (i32, i32) {
    %c0_i32 = arith.constant 0 : i32
    %c0_i32_0 = arith.constant 0 : i32
    return %arg0, %c0_i32 : i32, i32
  }
}

module attributes {stable_mosaic.version = 11 : i64} {
  func.func @_attention_kernel(%arg0: i32, %arg1: i32, %arg2: memref<1x1x8x8xbf16, #tpu.memory_space<vmem>>, %arg3: memref<1x1x8x8xbf16, #tpu.memory_space<vmem>>, %arg4: memref<1x1x8x8xbf16, #tpu.memory_space<vmem>>, %arg5: memref<1x1x8xf32, #tpu.memory_space<vmem>>, %arg6: memref<1x1x8x8xbf16, #tpu.memory_space<vmem>>) attributes {dimension_semantics = [#tpu.dimension_semantics<parallel>, #tpu.dimension_semantics<parallel>], iteration_bounds = array<i64: 2, 4>, scalar_prefetch = 0 : i64, scratch_operands = 0 : i64, tpu.core_type = #tpu.core_type<tc>, window_params = [{transform_indices = @transform_0, window_bounds = array<i64: 1, 1, 8, 8>}, {transform_indices = @transform_1, window_bounds = array<i64: 1, 1, 8, 8>}, {transform_indices = @transform_2, window_bounds = array<i64: 1, 1, 8, 8>}, {transform_indices = @transform_3, window_bounds = array<i64: 1, 1, 8>}, {transform_indices = @transform_4, window_bounds = array<i64: 1, 1, 8, 8>}]} {
    %c0 = arith.constant 0 : index
    %c0_0 = arith.constant 0 : index
    %c0_1 = arith.constant 0 : index
    %c0_2 = arith.constant 0 : index
    %0 = vector.load %arg2[%c0, %c0_0, %c0_1, %c0_2] : memref<1x1x8x8xbf16, #tpu.memory_space<vmem>>, vector<1x1x8x8xbf16>
    %1 = vector.shape_cast %0 : vector<1x1x8x8xbf16> to vector<8x8xbf16>
    %c0_3 = arith.constant 0 : index
    %c0_4 = arith.constant 0 : index
    %c0_5 = arith.constant 0 : index
    %c0_6 = arith.constant 0 : index
    %2 = vector.load %arg3[%c0_3, %c0_4, %c0_5, %c0_6] : memref<1x1x8x8xbf16, #tpu.memory_space<vmem>>, vector<1x1x8x8xbf16>
    %3 = vector.shape_cast %2 : vector<1x1x8x8xbf16> to vector<8x8xbf16>
    %c0_7 = arith.constant 0 : index
    %c0_8 = arith.constant 0 : index
    %c0_9 = arith.constant 0 : index
    %c0_10 = arith.constant 0 : index
    %4 = vector.load %arg4[%c0_7, %c0_8, %c0_9, %c0_10] : memref<1x1x8x8xbf16, #tpu.memory_space<vmem>>, vector<1x1x8x8xbf16>
    %5 = vector.shape_cast %4 : vector<1x1x8x8xbf16> to vector<8x8xbf16>
    %cst = arith.constant dense<0.000000e+00> : vector<8x8xf32>
    %6 = tpu.matmul %1, %3, %cst {dimension_numbers = #tpu.dot_dimension_numbers<[1], [1], [0], [0], [0, 0, 1, 0], [], []>} : vector<8x8xbf16>, vector<8x8xbf16>, vector<8x8xf32> -> vector<8x8xf32>
    %cst_11 = arith.constant 0.353553385 : f32
    %7 = vector.broadcast %cst_11 : f32 to vector<8x8xf32>
    %8 = arith.mulf %6, %7 : vector<8x8xf32>
    %c0_12 = arith.constant 0 : index
    %c0_13 = arith.constant 0 : index
    %c0_14 = arith.constant 0 : index
    %9 = vector.load %arg5[%c0_12, %c0_13, %c0_14] : memref<1x1x8xf32, #tpu.memory_space<vmem>>, vector<1x1x8xf32>
    %10 = vector.shape_cast %9 : vector<1x1x8xf32> to vector<1x8xf32>
    %cst_15 = arith.constant 0.000000e+00 : f32
    %11 = vector.broadcast %cst_15 : f32 to vector<1x8xf32>
    %12 = arith.cmpf oeq, %10, %11 : vector<1x8xf32>
    %cst_16 = arith.constant -3.40282347E+38 : f32
    %13 = vector.shape_cast %12 : vector<1x8xi1> to vector<1x8xi1>
    %14 = vector.broadcast %13 : vector<1x8xi1> to vector<8x8xi1>
    %15 = vector.broadcast %cst_16 : f32 to vector<8x8xf32>
    %16 = arith.select %14, %15, %8 : vector<8x8xi1>, vector<8x8xf32>
    %cst_17 = arith.constant dense<0xFF800000> : vector<8xf32>
    %17 = vector.multi_reduction <maximumf>, %16, %cst_17 [1] : vector<8x8xf32> to vector<8xf32>
    %18 = vector.shape_cast %17 : vector<8xf32> to vector<8x1xf32>
    %19 = vector.broadcast %18 : vector<8x1xf32> to vector<8x8xf32>
    %20 = arith.subf %16, %19 : vector<8x8xf32>
    %21 = math.exp %20 : vector<8x8xf32>
    %cst_18 = arith.constant dense<0.000000e+00> : vector<8xf32>
    %22 = vector.multi_reduction <add>, %21, %cst_18 [1] : vector<8x8xf32> to vector<8xf32>
    %23 = vector.shape_cast %22 : vector<8xf32> to vector<8x1xf32>
    %24 = tpu.reciprocal %23 {approx = true} : vector<8x1xf32> -> vector<8x1xf32>
    %25 = vector.broadcast %24 : vector<8x1xf32> to vector<8x8xf32>
    %26 = arith.mulf %21, %25 : vector<8x8xf32>
    %27 = arith.truncf %26 : vector<8x8xf32> to vector<8x8xbf16>
    %cst_19 = arith.constant dense<0.000000e+00> : vector<8x8xf32>
    %28 = tpu.matmul %27, %5, %cst_19 {dimension_numbers = #tpu.dot_dimension_numbers<[1], [0], [0], [1], [0, 0, 1, 1], [], []>} : vector<8x8xbf16>, vector<8x8xbf16>, vector<8x8xf32> -> vector<8x8xf32>
    %29 = vector.shape_cast %28 : vector<8x8xf32> to vector<1x1x8x8xf32>
    %30 = arith.truncf %29 : vector<1x1x8x8xf32> to vector<1x1x8x8xbf16>
    %c0_20 = arith.constant 0 : index
    %c0_21 = arith.constant 0 : index
    %c0_22 = arith.constant 0 : index
    %c0_23 = arith.constant 0 : index
    %31 = vector.load %arg6[%c0_20, %c0_21, %c0_22, %c0_23] : memref<1x1x8x8xbf16, #tpu.memory_space<vmem>>, vector<1x1x8x8xbf16>
    tpu.vector_store %arg6[%c0_20, %c0_21, %c0_22, %c0_23], %30 {strides = array<i32>} : memref<1x1x8x8xbf16, #tpu.memory_space<vmem>>, vector<1x1x8x8xbf16>,
    return
  }
  func.func @transform_0(%arg0: i32, %arg1: i32) -> (i32, i32, i32, i32) {
    %c0_i32 = arith.constant 0 : i32
    %c0_i32_0 = arith.constant 0 : i32
    %c0_i32_1 = arith.constant 0 : i32
    return %arg0, %arg1, %c0_i32, %c0_i32_0 : i32, i32, i32, i32
  }
  func.func @transform_1(%arg0: i32, %arg1: i32) -> (i32, i32, i32, i32) {
    %c0_i32 = arith.constant 0 : i32
    %c0_i32_0 = arith.constant 0 : i32
    %c0_i32_1 = arith.constant 0 : i32
    return %arg0, %arg1, %c0_i32, %c0_i32_0 : i32, i32, i32, i32
  }
  func.func @transform_2(%arg0: i32, %arg1: i32) -> (i32, i32, i32, i32) {
    %c0_i32 = arith.constant 0 : i32
    %c0_i32_0 = arith.constant 0 : i32
    %c0_i32_1 = arith.constant 0 : i32
    return %arg0, %arg1, %c0_i32, %c0_i32_0 : i32, i32, i32, i32
  }
  func.func @transform_3(%arg0: i32, %arg1: i32) -> (i32, i32, i32) {
    %c0_i32 = arith.constant 0 : i32
    %c0_i32_0 = arith.constant 0 : i32
    %c0_i32_1 = arith.constant 0 : i32
    return %arg0, %c0_i32, %c0_i32_0 : i32, i32, i32
  }
  func.func @transform_4(%arg0: i32, %arg1: i32) -> (i32, i32, i32, i32) {
    %c0_i32 = arith.constant 0 : i32
    %c0_i32_0 = arith.constant 0 : i32
    %c0_i32_1 = arith.constant 0 : i32
    return %arg0, %arg1, %c0_i32, %c0_i32_0 : i32, i32, i32, i32
  }
}

module attributes {stable_mosaic.version = 11 : i64} {
  func.func @_linear_add_ln_kernel(%arg0: i32, %arg1: i32, %arg2: memref<16x32xbf16, #tpu.memory_space<vmem>>, %arg3: memref<32x32xbf16, #tpu.memory_space<vmem>>, %arg4: memref<1x32xf32, #tpu.memory_space<vmem>>, %arg5: memref<16x32xbf16, #tpu.memory_space<vmem>>, %arg6: memref<1x32xf32, #tpu.memory_space<vmem>>, %arg7: memref<1x32xf32, #tpu.memory_space<vmem>>, %arg8: memref<16x32xbf16, #tpu.memory_space<vmem>>, %arg9: memref<16x32xf32, #tpu.memory_space<vmem>>) attributes {dimension_semantics = [#tpu.dimension_semantics<parallel>, #tpu.dimension_semantics<arbitrary>], iteration_bounds = array<i64: 1, 1>, scalar_prefetch = 0 : i64, scratch_operands = 1 : i64, tpu.core_type = #tpu.core_type<tc>, window_params = [{transform_indices = @transform_0, window_bounds = array<i64: 16, 32>}, {transform_indices = @transform_1, window_bounds = array<i64: 32, 32>}, {pipeline_mode = #tpu.pipeline_mode<synchronous>, transform_indices = @transform_2, window_bounds = array<i64: 1, 32>}, {transform_indices = @transform_3, window_bounds = array<i64: 16, 32>}, {pipeline_mode = #tpu.pipeline_mode<synchronous>, transform_indices = @transform_4, window_bounds = array<i64: 1, 32>}, {pipeline_mode = #tpu.pipeline_mode<synchronous>, transform_indices = @transform_5, window_bounds = array<i64: 1, 32>}, {transform_indices = @transform_6, window_bounds = array<i64: 16, 32>}]} {
    %c0_i32 = arith.constant 0 : i32
    %0 = arith.cmpi eq, %arg1, %c0_i32 : i32
    %1 = arith.extui %0 : i1 to i32
    %c0_i32_0 = arith.constant 0 : i32
    %2 = arith.cmpi ne, %1, %c0_i32_0 : i32
    scf.if %2 {
      %cst_10 = arith.constant 0.000000e+00 : f32
      %12 = vector.broadcast %cst_10 : f32 to vector<16x32xf32>
      %c0_11 = arith.constant 0 : index
      %c0_12 = arith.constant 0 : index
      %13 = vector.load %arg9[%c0_11, %c0_12] : memref<16x32xf32, #tpu.memory_space<vmem>>, vector<16x32xf32>
      tpu.vector_store %arg9[%c0_11, %c0_12], %12 {strides = array<i32>} : memref<16x32xf32, #tpu.memory_space<vmem>>, vector<16x32xf32>,
    } else {
    }
    %c0 = arith.constant 0 : index
    %c0_1 = arith.constant 0 : index
    %3 = vector.load %arg9[%c0, %c0_1] : memref<16x32xf32, #tpu.memory_space<vmem>>, vector<16x32xf32>
    %c0_2 = arith.constant 0 : index
    %c0_3 = arith.constant 0 : index
    %4 = vector.load %arg2[%c0_2, %c0_3] : memref<16x32xbf16, #tpu.memory_space<vmem>>, vector<16x32xbf16>
    %c0_4 = arith.constant 0 : index
    %c0_5 = arith.constant 0 : index
    %5 = vector.load %arg3[%c0_4, %c0_5] : memref<32x32xbf16, #tpu.memory_space<vmem>>, vector<32x32xbf16>
    %cst = arith.constant dense<0.000000e+00> : vector<16x32xf32>
    %6 = tpu.matmul %4, %5, %cst {dimension_numbers = #tpu.dot_dimension_numbers<[1], [0], [0], [1], [0, 0, 1, 1], [], []>} : vector<16x32xbf16>, vector<32x32xbf16>, vector<16x32xf32> -> vector<16x32xf32>
    %7 = arith.addf %3, %6 : vector<16x32xf32>
    %c0_6 = arith.constant 0 : index
    %c0_7 = arith.constant 0 : index
    %8 = vector.load %arg9[%c0_6, %c0_7] : memref<16x32xf32, #tpu.memory_space<vmem>>, vector<16x32xf32>
    tpu.vector_store %arg9[%c0_6, %c0_7], %7 {strides = array<i32>} : memref<16x32xf32, #tpu.memory_space<vmem>>, vector<16x32xf32>,
    %c0_i32_8 = arith.constant 0 : i32
    %9 = arith.cmpi eq, %arg1, %c0_i32_8 : i32
    %10 = arith.extui %9 : i1 to i32
    %c0_i32_9 = arith.constant 0 : i32
    %11 = arith.cmpi ne, %10, %c0_i32_9 : i32
    scf.if %11 {
      %c0_10 = arith.constant 0 : index
      %c0_11 = arith.constant 0 : index
      %12 = vector.load %arg9[%c0_10, %c0_11] : memref<16x32xf32, #tpu.memory_space<vmem>>, vector<16x32xf32>
      %c0_12 = arith.constant 0 : index
      %c0_13 = arith.constant 0 : index
      %13 = vector.load %arg4[%c0_12, %c0_13] : memref<1x32xf32, #tpu.memory_space<vmem>>, vector<1x32xf32>
      %14 = vector.broadcast %13 : vector<1x32xf32> to vector<16x32xf32>
      %15 = arith.addf %12, %14 : vector<16x32xf32>
      %c0_14 = arith.constant 0 : index
      %c0_15 = arith.constant 0 : index
      %16 = vector.load %arg5[%c0_14, %c0_15] : memref<16x32xbf16, #tpu.memory_space<vmem>>, vector<16x32xbf16>
      %17 = arith.extf %16 : vector<16x32xbf16> to vector<16x32xf32>
      %18 = arith.addf %15, %17 : vector<16x32xf32>
      %cst_16 = arith.constant dense<0.000000e+00> : vector<16xf32>
      %19 = vector.multi_reduction <add>, %18, %cst_16 [1] : vector<16x32xf32> to vector<16xf32>
      %20 = vector.shape_cast %19 : vector<16xf32> to vector<16x1xf32>
      %cst_17 = arith.constant 3.200000e+01 : f32
      %21 = vector.broadcast %cst_17 : f32 to vector<16x1xf32>
      %22 = arith.divf %20, %21 : vector<16x1xf32>
      %23 = vector.broadcast %22 : vector<16x1xf32> to vector<16x32xf32>
      %24 = arith.subf %18, %23 : vector<16x32xf32>
      %25 = arith.mulf %24, %24 : vector<16x32xf32>
      %cst_18 = arith.constant dense<0.000000e+00> : vector<16xf32>
      %26 = vector.multi_reduction <add>, %25, %cst_18 [1] : vector<16x32xf32> to vector<16xf32>
      %27 = vector.shape_cast %26 : vector<16xf32> to vector<16x1xf32>
      %cst_19 = arith.constant 3.200000e+01 : f32
      %28 = vector.broadcast %cst_19 : f32 to vector<16x1xf32>
      %29 = arith.divf %27, %28 : vector<16x1xf32>
      %30 = vector.broadcast %22 : vector<16x1xf32> to vector<16x32xf32>
      %31 = arith.subf %18, %30 : vector<16x32xf32>
      %cst_20 = arith.constant 9.99999996E-13 : f32
      %32 = vector.broadcast %cst_20 : f32 to vector<16x1xf32>
      %33 = arith.addf %29, %32 : vector<16x1xf32>
      %34 = math.rsqrt %33 : vector<16x1xf32>
      %35 = vector.broadcast %34 : vector<16x1xf32> to vector<16x32xf32>
      %36 = arith.mulf %31, %35 : vector<16x32xf32>
      %c0_21 = arith.constant 0 : index
      %c0_22 = arith.constant 0 : index
      %37 = vector.load %arg6[%c0_21, %c0_22] : memref<1x32xf32, #tpu.memory_space<vmem>>, vector<1x32xf32>
      %38 = vector.broadcast %37 : vector<1x32xf32> to vector<16x32xf32>
      %39 = arith.mulf %36, %38 : vector<16x32xf32>
      %c0_23 = arith.constant 0 : index
      %c0_24 = arith.constant 0 : index
      %40 = vector.load %arg7[%c0_23, %c0_24] : memref<1x32xf32, #tpu.memory_space<vmem>>, vector<1x32xf32>
      %41 = vector.broadcast %40 : vector<1x32xf32> to vector<16x32xf32>
      %42 = arith.addf %39, %41 : vector<16x32xf32>
      %43 = arith.truncf %42 : vector<16x32xf32> to vector<16x32xbf16>
      %c0_25 = arith.constant 0 : index
      %c0_26 = arith.constant 0 : index
      %44 = vector.load %arg8[%c0_25, %c0_26] : memref<16x32xbf16, #tpu.memory_space<vmem>>, vector<16x32xbf16>
      tpu.vector_store %arg8[%c0_25, %c0_26], %43 {strides = array<i32>} : memref<16x32xbf16, #tpu.memory_space<vmem>>, vector<16x32xbf16>,
    } else {
    }
    return
  }
  func.func @transform_0(%arg0: i32, %arg1: i32) -> (i32, i32) {
    %c0_i32 = arith.constant 0 : i32
    return %arg0, %arg1 : i32, i32
  }
  func.func @transform_1(%arg0: i32, %arg1: i32) -> (i32, i32) {
    %c0_i32 = arith.constant 0 : i32
    %c0_i32_0 = arith.constant 0 : i32
    return %arg1, %c0_i32 : i32, i32
  }
  func.func @transform_2(%arg0: i32, %arg1: i32) -> (i32, i32) {
    %c0_i32 = arith.constant 0 : i32
    %c0_i32_0 = arith.constant 0 : i32
    %c0_i32_1 = arith.constant 0 : i32
    return %c0_i32, %c0_i32_0 : i32, i32
  }
  func.func @transform_3(%arg0: i32, %arg1: i32) -> (i32, i32) {
    %c0_i32 = arith.constant 0 : i32
    %c0_i32_0 = arith.constant 0 : i32
    return %arg0, %c0_i32 : i32, i32
  }
  func.func @transform_4(%arg0: i32, %arg1: i32) -> (i32, i32) {
    %c0_i32 = arith.constant 0 : i32
    %c0_i32_0 = arith.constant 0 : i32
    %c0_i32_1 = arith.constant 0 : i32
    return %c0_i32, %c0_i32_0 : i32, i32
  }
  func.func @transform_5(%arg0: i32, %arg1: i32) -> (i32, i32) {
    %c0_i32 = arith.constant 0 : i32
    %c0_i32_0 = arith.constant 0 : i32
    %c0_i32_1 = arith.constant 0 : i32
    return %c0_i32, %c0_i32_0 : i32, i32
  }
  func.func @transform_6(%arg0: i32, %arg1: i32) -> (i32, i32) {
    %c0_i32 = arith.constant 0 : i32
    %c0_i32_0 = arith.constant 0 : i32
    return %arg0, %c0_i32 : i32, i32
  }
}

module attributes {stable_mosaic.version = 11 : i64} {
  func.func @_ffn_add_ln_kernel(%arg0: i32, %arg1: i32, %arg2: memref<16x32xbf16, #tpu.memory_space<vmem>>, %arg3: memref<32x64xbf16, #tpu.memory_space<vmem>>, %arg4: memref<1x64xf32, #tpu.memory_space<vmem>>, %arg5: memref<64x32xbf16, #tpu.memory_space<vmem>>, %arg6: memref<1x32xf32, #tpu.memory_space<vmem>>, %arg7: memref<1x32xf32, #tpu.memory_space<vmem>>, %arg8: memref<1x32xf32, #tpu.memory_space<vmem>>, %arg9: memref<16x32xbf16, #tpu.memory_space<vmem>>, %arg10: memref<16x32xf32, #tpu.memory_space<vmem>>) attributes {dimension_semantics = [#tpu.dimension_semantics<parallel>, #tpu.dimension_semantics<arbitrary>], iteration_bounds = array<i64: 1, 1>, scalar_prefetch = 0 : i64, scratch_operands = 1 : i64, tpu.core_type = #tpu.core_type<tc>, window_params = [{transform_indices = @transform_0, window_bounds = array<i64: 16, 32>}, {transform_indices = @transform_1, window_bounds = array<i64: 32, 64>}, {transform_indices = @transform_2, window_bounds = array<i64: 1, 64>}, {transform_indices = @transform_3, window_bounds = array<i64: 64, 32>}, {pipeline_mode = #tpu.pipeline_mode<synchronous>, transform_indices = @transform_4, window_bounds = array<i64: 1, 32>}, {pipeline_mode = #tpu.pipeline_mode<synchronous>, transform_indices = @transform_5, window_bounds = array<i64: 1, 32>}, {pipeline_mode = #tpu.pipeline_mode<synchronous>, transform_indices = @transform_6, window_bounds = array<i64: 1, 32>}, {transform_indices = @transform_7, window_bounds = array<i64: 16, 32>}]} {
    %c0_i32 = arith.constant 0 : i32
    %0 = arith.cmpi eq, %arg1, %c0_i32 : i32
    %1 = arith.extui %0 : i1 to i32
    %c0_i32_0 = arith.constant 0 : i32
    %2 = arith.cmpi ne, %1, %c0_i32_0 : i32
    scf.if %2 {
      %cst_19 = arith.constant 0.000000e+00 : f32
      %31 = vector.broadcast %cst_19 : f32 to vector<16x32xf32>
      %c0_20 = arith.constant 0 : index
      %c0_21 = arith.constant 0 : index
      %32 = vector.load %arg10[%c0_20, %c0_21] : memref<16x32xf32, #tpu.memory_space<vmem>>, vector<16x32xf32>
      tpu.vector_store %arg10[%c0_20, %c0_21], %31 {strides = array<i32>} : memref<16x32xf32, #tpu.memory_space<vmem>>, vector<16x32xf32>,
    } else {
    }
    %c0 = arith.constant 0 : index
    %c0_1 = arith.constant 0 : index
    %3 = vector.load %arg2[%c0, %c0_1] : memref<16x32xbf16, #tpu.memory_space<vmem>>, vector<16x32xbf16>
    %c0_2 = arith.constant 0 : index
    %c0_3 = arith.constant 0 : index
    %4 = vector.load %arg3[%c0_2, %c0_3] : memref<32x64xbf16, #tpu.memory_space<vmem>>, vector<32x64xbf16>
    %cst = arith.constant dense<0.000000e+00> : vector<16x64xf32>
    %5 = tpu.matmul %3, %4, %cst {dimension_numbers = #tpu.dot_dimension_numbers<[1], [0], [0], [1], [0, 0, 1, 1], [], []>} : vector<16x32xbf16>, vector<32x64xbf16>, vector<16x64xf32> -> vector<16x64xf32>
    %c0_4 = arith.constant 0 : index
    %c0_5 = arith.constant 0 : index
    %6 = vector.load %arg4[%c0_4, %c0_5] : memref<1x64xf32, #tpu.memory_space<vmem>>, vector<1x64xf32>
    %7 = vector.broadcast %6 : vector<1x64xf32> to vector<16x64xf32>
    %8 = arith.addf %5, %7 : vector<16x64xf32>
    %cst_6 = arith.constant 5.000000e-01 : f32
    %9 = vector.broadcast %cst_6 : f32 to vector<16x64xf32>
    %10 = arith.mulf %9, %8 : vector<16x64xf32>
    %cst_7 = arith.constant 4.471500e-02 : f32
    %11 = vector.broadcast %cst_7 : f32 to vector<16x64xf32>
    %12 = arith.mulf %11, %8 : vector<16x64xf32>
    %13 = arith.mulf %12, %8 : vector<16x64xf32>
    %14 = arith.mulf %13, %8 : vector<16x64xf32>
    %15 = arith.addf %8, %14 : vector<16x64xf32>
    %cst_8 = arith.constant 0.797884583 : f32
    %16 = vector.broadcast %cst_8 : f32 to vector<16x64xf32>
    %17 = arith.mulf %16, %15 : vector<16x64xf32>
    %18 = math.tanh %17 : vector<16x64xf32>
    %cst_9 = arith.constant 1.000000e+00 : f32
    %19 = vector.broadcast %cst_9 : f32 to vector<16x64xf32>
    %20 = arith.addf %19, %18 : vector<16x64xf32>
    %21 = arith.mulf %10, %20 : vector<16x64xf32>
    %c0_10 = arith.constant 0 : index
    %c0_11 = arith.constant 0 : index
    %22 = vector.load %arg10[%c0_10, %c0_11] : memref<16x32xf32, #tpu.memory_space<vmem>>, vector<16x32xf32>
    %23 = arith.truncf %21 : vector<16x64xf32> to vector<16x64xbf16>
    %c0_12 = arith.constant 0 : index
    %c0_13 = arith.constant 0 : index
    %24 = vector.load %arg5[%c0_12, %c0_13] : memref<64x32xbf16, #tpu.memory_space<vmem>>, vector<64x32xbf16>
    %cst_14 = arith.constant dense<0.000000e+00> : vector<16x32xf32>
    %25 = tpu.matmul %23, %24, %cst_14 {dimension_numbers = #tpu.dot_dimension_numbers<[1], [0], [0], [1], [0, 0, 1, 1], [], []>} : vector<16x64xbf16>, vector<64x32xbf16>, vector<16x32xf32> -> vector<16x32xf32>
    %26 = arith.addf %22, %25 : vector<16x32xf32>
    %c0_15 = arith.constant 0 : index
    %c0_16 = arith.constant 0 : index
    %27 = vector.load %arg10[%c0_15, %c0_16] : memref<16x32xf32, #tpu.memory_space<vmem>>, vector<16x32xf32>
    tpu.vector_store %arg10[%c0_15, %c0_16], %26 {strides = array<i32>} : memref<16x32xf32, #tpu.memory_space<vmem>>, vector<16x32xf32>,
    %c0_i32_17 = arith.constant 0 : i32
    %28 = arith.cmpi eq, %arg1, %c0_i32_17 : i32
    %29 = arith.extui %28 : i1 to i32
    %c0_i32_18 = arith.constant 0 : i32
    %30 = arith.cmpi ne, %29, %c0_i32_18 : i32
    scf.if %30 {
      %c0_19 = arith.constant 0 : index
      %c0_20 = arith.constant 0 : index
      %31 = vector.load %arg10[%c0_19, %c0_20] : memref<16x32xf32, #tpu.memory_space<vmem>>, vector<16x32xf32>
      %c0_21 = arith.constant 0 : index
      %c0_22 = arith.constant 0 : index
      %32 = vector.load %arg6[%c0_21, %c0_22] : memref<1x32xf32, #tpu.memory_space<vmem>>, vector<1x32xf32>
      %33 = vector.broadcast %32 : vector<1x32xf32> to vector<16x32xf32>
      %34 = arith.addf %31, %33 : vector<16x32xf32>
      %c0_23 = arith.constant 0 : index
      %c0_24 = arith.constant 0 : index
      %35 = vector.load %arg2[%c0_23, %c0_24] : memref<16x32xbf16, #tpu.memory_space<vmem>>, vector<16x32xbf16>
      %36 = arith.extf %35 : vector<16x32xbf16> to vector<16x32xf32>
      %37 = arith.addf %34, %36 : vector<16x32xf32>
      %cst_25 = arith.constant dense<0.000000e+00> : vector<16xf32>
      %38 = vector.multi_reduction <add>, %37, %cst_25 [1] : vector<16x32xf32> to vector<16xf32>
      %39 = vector.shape_cast %38 : vector<16xf32> to vector<16x1xf32>
      %cst_26 = arith.constant 3.200000e+01 : f32
      %40 = vector.broadcast %cst_26 : f32 to vector<16x1xf32>
      %41 = arith.divf %39, %40 : vector<16x1xf32>
      %42 = vector.broadcast %41 : vector<16x1xf32> to vector<16x32xf32>
      %43 = arith.subf %37, %42 : vector<16x32xf32>
      %44 = arith.mulf %43, %43 : vector<16x32xf32>
      %cst_27 = arith.constant dense<0.000000e+00> : vector<16xf32>
      %45 = vector.multi_reduction <add>, %44, %cst_27 [1] : vector<16x32xf32> to vector<16xf32>
      %46 = vector.shape_cast %45 : vector<16xf32> to vector<16x1xf32>
      %cst_28 = arith.constant 3.200000e+01 : f32
      %47 = vector.broadcast %cst_28 : f32 to vector<16x1xf32>
      %48 = arith.divf %46, %47 : vector<16x1xf32>
      %49 = vector.broadcast %41 : vector<16x1xf32> to vector<16x32xf32>
      %50 = arith.subf %37, %49 : vector<16x32xf32>
      %cst_29 = arith.constant 9.99999996E-13 : f32
      %51 = vector.broadcast %cst_29 : f32 to vector<16x1xf32>
      %52 = arith.addf %48, %51 : vector<16x1xf32>
      %53 = math.rsqrt %52 : vector<16x1xf32>
      %54 = vector.broadcast %53 : vector<16x1xf32> to vector<16x32xf32>
      %55 = arith.mulf %50, %54 : vector<16x32xf32>
      %c0_30 = arith.constant 0 : index
      %c0_31 = arith.constant 0 : index
      %56 = vector.load %arg7[%c0_30, %c0_31] : memref<1x32xf32, #tpu.memory_space<vmem>>, vector<1x32xf32>
      %57 = vector.broadcast %56 : vector<1x32xf32> to vector<16x32xf32>
      %58 = arith.mulf %55, %57 : vector<16x32xf32>
      %c0_32 = arith.constant 0 : index
      %c0_33 = arith.constant 0 : index
      %59 = vector.load %arg8[%c0_32, %c0_33] : memref<1x32xf32, #tpu.memory_space<vmem>>, vector<1x32xf32>
      %60 = vector.broadcast %59 : vector<1x32xf32> to vector<16x32xf32>
      %61 = arith.addf %58, %60 : vector<16x32xf32>
      %62 = arith.truncf %61 : vector<16x32xf32> to vector<16x32xbf16>
      %c0_34 = arith.constant 0 : index
      %c0_35 = arith.constant 0 : index
      %63 = vector.load %arg9[%c0_34, %c0_35] : memref<16x32xbf16, #tpu.memory_space<vmem>>, vector<16x32xbf16>
      tpu.vector_store %arg9[%c0_34, %c0_35], %62 {strides = array<i32>} : memref<16x32xbf16, #tpu.memory_space<vmem>>, vector<16x32xbf16>,
    } else {
    }
    return
  }
  func.func @transform_0(%arg0: i32, %arg1: i32) -> (i32, i32) {
    %c0_i32 = arith.constant 0 : i32
    %c0_i32_0 = arith.constant 0 : i32
    return %arg0, %c0_i32 : i32, i32
  }
  func.func @transform_1(%arg0: i32, %arg1: i32) -> (i32, i32) {
    %c0_i32 = arith.constant 0 : i32
    %c0_i32_0 = arith.constant 0 : i32
    return %c0_i32, %arg1 : i32, i32
  }
  func.func @transform_2(%arg0: i32, %arg1: i32) -> (i32, i32) {
    %c0_i32 = arith.constant 0 : i32
    %c0_i32_0 = arith.constant 0 : i32
    return %c0_i32, %arg1 : i32, i32
  }
  func.func @transform_3(%arg0: i32, %arg1: i32) -> (i32, i32) {
    %c0_i32 = arith.constant 0 : i32
    %c0_i32_0 = arith.constant 0 : i32
    return %arg1, %c0_i32 : i32, i32
  }
  func.func @transform_4(%arg0: i32, %arg1: i32) -> (i32, i32) {
    %c0_i32 = arith.constant 0 : i32
    %c0_i32_0 = arith.constant 0 : i32
    %c0_i32_1 = arith.constant 0 : i32
    return %c0_i32, %c0_i32_0 : i32, i32
  }
  func.func @transform_5(%arg0: i32, %arg1: i32) -> (i32, i32) {
    %c0_i32 = arith.constant 0 : i32
    %c0_i32_0 = arith.constant 0 : i32
    %c0_i32_1 = arith.constant 0 : i32
    return %c0_i32, %c0_i32_0 : i32, i32
  }
  func.func @transform_6(%arg0: i32, %arg1: i32) -> (i32, i32) {
    %c0_i32 = arith.constant 0 : i32
    %c0_i32_0 = arith.constant 0 : i32
    %c0_i32_1 = arith.constant 0 : i32
    return %c0_i32, %c0_i32_0 : i32, i32
  }
  func.func @transform_7(%arg0: i32, %arg1: i32) -> (i32, i32) {
    %c0_i32 = arith.constant 0 : i32
    %c0_i32_0 = arith.constant 0 : i32
    return %arg0, %c0_i32 : i32, i32
  }
}

module attributes {stable_mosaic.version = 11 : i64} {
  func.func @_linear_kernel(%arg0: i32, %arg1: i32, %arg2: i32, %arg3: memref<2x32xbf16, #tpu.memory_space<vmem>>, %arg4: memref<32x128xbf16, #tpu.memory_space<vmem>>, %arg5: memref<1x128xf32, #tpu.memory_space<vmem>>, %arg6: memref<2x128xf32, #tpu.memory_space<vmem>>, %arg7: memref<2x128xf32, #tpu.memory_space<vmem>>) attributes {dimension_semantics = [#tpu.dimension_semantics<parallel>, #tpu.dimension_semantics<parallel>, #tpu.dimension_semantics<arbitrary>], iteration_bounds = array<i64: 1, 1, 1>, scalar_prefetch = 0 : i64, scratch_operands = 1 : i64, tpu.core_type = #tpu.core_type<tc>, window_params = [{transform_indices = @transform_0, window_bounds = array<i64: 2, 32>}, {transform_indices = @transform_1, window_bounds = array<i64: 32, 128>}, {transform_indices = @transform_2, window_bounds = array<i64: 1, 128>}, {transform_indices = @transform_3, window_bounds = array<i64: 2, 128>}]} {
    %c0_i32 = arith.constant 0 : i32
    %0 = arith.cmpi eq, %arg2, %c0_i32 : i32
    %1 = arith.extui %0 : i1 to i32
    %c0_i32_0 = arith.constant 0 : i32
    %2 = arith.cmpi ne, %1, %c0_i32_0 : i32
    scf.if %2 {
      %cst_10 = arith.constant 0.000000e+00 : f32
      %12 = vector.broadcast %cst_10 : f32 to vector<2x128xf32>
      %c0_11 = arith.constant 0 : index
      %c0_12 = arith.constant 0 : index
      %13 = vector.load %arg7[%c0_11, %c0_12] : memref<2x128xf32, #tpu.memory_space<vmem>>, vector<2x128xf32>
      tpu.vector_store %arg7[%c0_11, %c0_12], %12 {strides = array<i32>} : memref<2x128xf32, #tpu.memory_space<vmem>>, vector<2x128xf32>,
    } else {
    }
    %c0 = arith.constant 0 : index
    %c0_1 = arith.constant 0 : index
    %3 = vector.load %arg7[%c0, %c0_1] : memref<2x128xf32, #tpu.memory_space<vmem>>, vector<2x128xf32>
    %c0_2 = arith.constant 0 : index
    %c0_3 = arith.constant 0 : index
    %4 = vector.load %arg3[%c0_2, %c0_3] : memref<2x32xbf16, #tpu.memory_space<vmem>>, vector<2x32xbf16>
    %c0_4 = arith.constant 0 : index
    %c0_5 = arith.constant 0 : index
    %5 = vector.load %arg4[%c0_4, %c0_5] : memref<32x128xbf16, #tpu.memory_space<vmem>>, vector<32x128xbf16>
    %cst = arith.constant dense<0.000000e+00> : vector<2x128xf32>
    %6 = tpu.matmul %4, %5, %cst {dimension_numbers = #tpu.dot_dimension_numbers<[1], [0], [0], [1], [0, 0, 1, 1], [], []>} : vector<2x32xbf16>, vector<32x128xbf16>, vector<2x128xf32> -> vector<2x128xf32>
    %7 = arith.addf %3, %6 : vector<2x128xf32>
    %c0_6 = arith.constant 0 : index
    %c0_7 = arith.constant 0 : index
    %8 = vector.load %arg7[%c0_6, %c0_7] : memref<2x128xf32, #tpu.memory_space<vmem>>, vector<2x128xf32>
    tpu.vector_store %arg7[%c0_6, %c0_7], %7 {strides = array<i32>} : memref<2x128xf32, #tpu.memory_space<vmem>>, vector<2x128xf32>,
    %c0_i32_8 = arith.constant 0 : i32
    %9 = arith.cmpi eq, %arg2, %c0_i32_8 : i32
    %10 = arith.extui %9 : i1 to i32
    %c0_i32_9 = arith.constant 0 : i32
    %11 = arith.cmpi ne, %10, %c0_i32_9 : i32
    scf.if %11 {
      %c0_10 = arith.constant 0 : index
      %c0_11 = arith.constant 0 : index
      %12 = vector.load %arg7[%c0_10, %c0_11] : memref<2x128xf32, #tpu.memory_space<vmem>>, vector<2x128xf32>
      %c0_12 = arith.constant 0 : index
      %c0_13 = arith.constant 0 : index
      %13 = vector.load %arg5[%c0_12, %c0_13] : memref<1x128xf32, #tpu.memory_space<vmem>>, vector<1x128xf32>
      %14 = vector.broadcast %13 : vector<1x128xf32> to vector<2x128xf32>
      %15 = arith.addf %12, %14 : vector<2x128xf32>
      %16 = arith.negf %15 : vector<2x128xf32>
      %17 = math.exp %16 : vector<2x128xf32>
      %cst_14 = arith.constant 1.000000e+00 : f32
      %18 = vector.broadcast %cst_14 : f32 to vector<2x128xf32>
      %19 = arith.addf %18, %17 : vector<2x128xf32>
      %20 = arith.divf %18, %19 : vector<2x128xf32>
      %c0_15 = arith.constant 0 : index
      %c0_16 = arith.constant 0 : index
      %21 = vector.load %arg6[%c0_15, %c0_16] : memref<2x128xf32, #tpu.memory_space<vmem>>, vector<2x128xf32>
      tpu.vector_store %arg6[%c0_15, %c0_16], %20 {strides = array<i32>} : memref<2x128xf32, #tpu.memory_space<vmem>>, vector<2x128xf32>,
    } else {
    }
    return
  }
  func.func @transform_0(%arg0: i32, %arg1: i32, %arg2: i32) -> (i32, i32) {
    %c0_i32 = arith.constant 0 : i32
    return %arg0, %arg2 : i32, i32
  }
  func.func @transform_1(%arg0: i32, %arg1: i32, %arg2: i32) -> (i32, i32) {
    %c0_i32 = arith.constant 0 : i32
    return %arg2, %arg1 : i32, i32
  }
  func.func @transform_2(%arg0: i32, %arg1: i32, %arg2: i32) -> (i32, i32) {
    %c0_i32 = arith.constant 0 : i32
    %c0_i32_0 = arith.constant 0 : i32
    return %c0_i32, %arg1 : i32, i32
  }
  func.func @transform_3(%arg0: i32, %arg1: i32, %arg2: i32) -> (i32, i32) {
    %c0_i32 = arith.constant 0 : i32
    return %arg0, %arg1 : i32, i32
  }
}

</mosaic_0001>

<llo_original>
// kernel: distilbert_forward.11
$region0: #{distilbert_forward.11}
  #allocation0 [shape = 'u32[]', space=smem, size = 0x4, offset = 0x4, fixed_abs, tag = 'smem constant byte address 0x4 - core index']
  #allocation1 [shape = 'u32[144,128]{1,0:T(1,128)}', space=vmem, size = 0x12000, scoped, tag = 'internal scratch']
  #allocation2 [shape = 'f32[16,96]{1,0:T(8,128)}', space=vmem, size = 0x2000, scoped, tag = 'scratch operand']
  %s0 = inlined_call_operand.vmem [shape: bf16[16,32], index: 0, kind: input, shape index: {}]
  %s1 = inlined_call_operand.vmem [shape: bf16[32,96], index: 1, kind: input, shape index: {}]
  %s2 = inlined_call_operand.vmem [shape: f32[1,96], index: 2, kind: input, shape index: {}]
  %s3 = inlined_call_operand.vmem [shape: bf16[16,96], index: 3, kind: output, shape index: {}]
  %s4 = sld [smem:[#allocation0]]
  $region30: #{distilbert_forward.11} parent=0
    _
  %s6 = ssub.s32 1, %s4
  %s7 = scalar_select 0, %s6, %s4
  // Predicated region
  $region2: #{distilbert_forward.11} parent=0 // pred_check
    _
  $region3: #{distilbert_forward.11} parent=0 // pred_check_branch
    %9 = sbr.rel (0) target = $region5
  $region4: #{distilbert_forward.11} parent=0 // pred_region
    _
  $region5: #{distilbert_forward.11} parent=0 // pred_fallthru
    _
  // Predicated region
  $region6: #{distilbert_forward.11} parent=0 // pred_check
    _
  $region7: #{distilbert_forward.11} parent=0 // pred_check_branch
    %11 = sbr.rel (0) target = $region9
  $region8: #{distilbert_forward.11} parent=0 // pred_region
    _
  $region9: #{distilbert_forward.11} parent=0 // pred_fallthru
    _
  // Predicated region
  $region10: #{distilbert_forward.11} parent=0 // pred_check
    _
  $region11: #{distilbert_forward.11} parent=0 // pred_check_branch
    %13 = sbr.rel (0) target = $region13
  $region12: #{distilbert_forward.11} parent=0 // pred_region
    _
  $region13: #{distilbert_forward.11} parent=0 // pred_fallthru
    _
  %p15 = scmp.eq.s32.totalorder 0, 0
  // Predicated region
  $region14: #{distilbert_forward.11} parent=0 // pred_check
    %p16 = pneg %p15
  $region15: #{distilbert_forward.11} parent=0 // pred_check_branch
    %18 = sbr.rel (%p16) target = $region17
  $region16: #{distilbert_forward.11} parent=0 // pred_region
    %vm19 = vcmask 785408
    %20 = vst.msk [vmem:[#allocation2] sm:$0xff] %vm19, 0.0
    %21 = vst.msk [vmem:[#allocation2 + $0x8] sm:$0xff] %vm19, 0.0
  $region17: #{distilbert_forward.11} parent=0 // pred_fallthru
    _
  %v22 = vld [vmem:[#allocation2] sm:$0xff]
  %v23 = vld [vmem:[#allocation2 + $0x8] sm:$0xff]
  %v24 = vld [vmem:[%s0] sm:$0xf]
  %v25 = vld [vmem:[%s0 + $0x4] sm:$0xf]
  %v26 = vld [vmem:[%s1] sm:$0xf]
  %v27 = vld [vmem:[%s1 + $0x4] sm:$0xf]
  %v28 = vld [vmem:[%s1 + $0x8] sm:$0xf]
  %v29 = vld [vmem:[%s1 + $0xc] sm:$0xf]
  %v32 = vunpack.c.l.b16 %v24
  %v33 = vunpack.c.l.b16 %v25
  %v34 = vpack.c.b16 %v33, %v32
  %v39 = vunpack.c.l.b16 %v26
  %v40 = vunpack.c.l.b16 %v27
  %v41 = vunpack.c.l.b16 %v28
  %v42 = vunpack.c.l.b16 %v29
  %v43 = vpack.c.b16 %v40, %v39
  %v44 = vpack.c.b16 %v42, %v41
  %vm47 = vcmask 261120
  %v49 = vsel %vm47, %v34, 0
  %51 = vmatprep.subr.bf16.mxu0 0
  %52 = vmatpush1.bf16.msra.mxu0 %v43
  %53 = vmatprep.subr.bf16.mxu0 0
  %54 = vmatpush1.bf16.msra.mxu0 %v44
  %55 = vmatprep.subr.bf16.mxu0 0
  %56 = vmatpush1.bf16.msra.mxu0 0
  %57 = vmatprep.subr.bf16.mxu0 0
  %58 = vmatpush1.bf16.msra.mxu0 0
  %59 = vmatprep.subr.bf16.mxu0 0
  %60 = vmatpush1.bf16.msra.mxu0 0
  %61 = vmatprep.subr.bf16.mxu0 0
  %62 = vmatpush1.bf16.msra.mxu0 0
  %63 = vmatprep.subr.bf16.mxu0 0
  %64 = vmatpush1.bf16.msra.mxu0 0
  %65 = vmatprep.subr.bf16.mxu0 0
  %66 = vmatpush1.bf16.msra.mxu0 0
  %67 = vmatprep.subr.bf16.mxu0 0
  %68 = vmatpush1.bf16.msra.mxu0 0
  %69 = vmatprep.subr.bf16.mxu0 0
  %70 = vmatpush1.bf16.msra.mxu0 0
  %71 = vmatprep.subr.bf16.mxu0 0
  %72 = vmatpush1.bf16.msra.mxu0 0
  %73 = vmatprep.subr.bf16.mxu0 0
  %74 = vmatpush1.bf16.msra.mxu0 0
  %75 = vmatprep.subr.bf16.mxu0 0
  %76 = vmatpush1.bf16.msra.mxu0 0
  %77 = vmatprep.subr.bf16.mxu0 0
  %78 = vmatpush1.bf16.msra.mxu0 0
  %79 = vmatprep.subr.bf16.mxu0 0
  %80 = vmatpush1.bf16.msra.mxu0 0
  %81 = vmatprep.subr.bf16.mxu0 0
  %82 = vmatpush1.bf16.msra.mxu0 0
  %83 = vmatprep.mubr.bf16.mxu0 0
  %84 = vmatmul.mubr.bf16.gmra.mrb[0].mxu0 %v49
  %v85 = vpop.f32.mrb[0].mxu0
  %v86 = vadd.f32 0.0, %v85
  %v87 = vpop.f32.mrb[0].mxu0
  %v88 = vpop.f32.mrb[0].mxu0
  %v89 = vadd.f32 0.0, %v88
  %v90 = vpop.f32.mrb[0].mxu0
  %91 = vdwg.mxu0
  %v92 = vadd.f32 %v22, %v86
  %v93 = vadd.f32 %v23, %v89
  %vm94 = vcmask 785408
  %95 = vst.msk [vmem:[#allocation2] sm:$0xff] %vm94, %v92
  %96 = vst.msk [vmem:[#allocation2 + $0x8] sm:$0xff] %vm94, %v93
  // Predicated region
  $region18: #{distilbert_forward.11} parent=0 // pred_check
    %p97 = pneg %p15
  $region19: #{distilbert_forward.11} parent=0 // pred_check_branch
    %99 = sbr.rel (%p97) target = $region21
  $region20: #{distilbert_forward.11} parent=0 // pred_region
    %v100 = vld [vmem:[#allocation2] sm:$0xff]
    %v101 = vld [vmem:[#allocation2 + $0x8] sm:$0xff]
    %v102 = vld [vmem:[%s2] sm:$0x1]
    %v104 = vlaneseq
    %v105 = vshrl.u32 %v104, 7
    %v106 = vsub.s32 0, %v105
    %v107 = vrot.slane %v102, %v106
    %v109 = vadd.f32 %v100, %v107
    %v110 = vadd.f32 %v101, %v107
    %v111 = vpack.c.bf16 %v110, %v109
    %v113 = vunpack.c.l.b16 %v111
    %v114 = vunpack.c.h.b16 %v111
    %v115 = vpack.c.b16 %v113, %v113
    %v116 = vpack.c.b16 %v114, %v114
    %vm119 = vcmask 781312
    %120 = vst.msk [vmem:[%s3] sm:$0xf] %vm119, %v115
    %121 = vst.msk [vmem:[%s3 + $0x4] sm:$0xf] %vm119, %v116
  $region21: #{distilbert_forward.11} parent=0 // pred_fallthru
    _
  // Predicated region
  $region22: #{distilbert_forward.11} parent=0 // pred_check
    _
  $region23: #{distilbert_forward.11} parent=0 // pred_check_branch
    %123 = sbr.rel (0) target = $region25
  $region24: #{distilbert_forward.11} parent=0 // pred_region
    _
  $region25: #{distilbert_forward.11} parent=0 // pred_fallthru
    _
  // Predicated region
  $region26: #{distilbert_forward.11} parent=0 // pred_check
    _
  $region27: #{distilbert_forward.11} parent=0 // pred_check_branch
    %125 = sbr.rel (0) target = $region29
  $region28: #{distilbert_forward.11} parent=0 // pred_region
    _
  $region29: #{distilbert_forward.11} parent=0 // pred_fallthru
    _

// kernel: distilbert_forward.12
$region0: #{distilbert_forward.12}
  #allocation0 [shape = 'u32[]', space=smem, size = 0x4, offset = 0x4, fixed_abs, tag = 'smem constant byte address 0x4 - core index']
  #allocation1 [shape = 'u32[144,128]{1,0:T(1,128)}', space=vmem, size = 0x12000, scoped, tag = 'internal scratch']
  %s0 = inlined_call_operand.vmem [shape: bf16[2,4,8,8], index: 0, kind: input, shape index: {}]
  %s1 = inlined_call_operand.vmem [shape: bf16[2,4,8,8], index: 1, kind: input, shape index: {}]
  %s2 = inlined_call_operand.vmem [shape: bf16[2,4,8,8], index: 2, kind: input, shape index: {}]
  %s3 = inlined_call_operand.vmem [shape: f32[2,1,8], index: 3, kind: input, shape index: {}]
  %s4 = inlined_call_operand.vmem [shape: bf16[2,4,8,8], index: 4, kind: output, shape index: {}]
  %s5 = sld [smem:[#allocation0]]
  $region49: #{distilbert_forward.12} parent=0
    _
  %s7 = ssub.s32 1, %s5
  %s8 = scalar_select 0, %s7, %s5
  loop: start=0, step=1, limit=10
  $region2: #{distilbert_forward.12} parent=0 // loop_pre_header
    _
  $region3: #{distilbert_forward.12} parent=0 // loop_header
    %s10 = sphi 0, %s14
    %p11 = scmp.ge.s32.totalorder %s10, 10
    %s17 = sphi 0, %s29
    %s18 = sphi 0, %s25
    %s19 = sphi 0, %s17
    %s20 = sphi 0, %s18
    %s21 = sphi 0, %s19
    %s22 = sphi 0, %s20
    %s34 = sphi 0, %s36
    %s37 = sphi 0, %s34
    %s38 = sphi 0, %s37
    %s54 = sphi 0, %s38
    %s62 = sphi 0, %s64
    %s65 = sphi 0, %s62
    %s66 = sphi 0, %s65
    %s82 = sphi 0, %s66
    %s90 = sphi 0, %s92
    %s93 = sphi 0, %s90
    %s94 = sphi 0, %s93
    %s110 = sphi 0, %s94
    %s116 = sphi 0, %s118
    %s119 = sphi 0, %s116
    %s120 = sphi 0, %s119
    %s136 = sphi 0, %s120
    %s144 = sphi 0, %s146
    %s147 = sphi 0, %s144
    %s148 = sphi 0, %s147
    %s164 = sphi 0, %s148
  $region4: #{distilbert_forward.12} parent=0 // loop_header_branch
    %13 = sbr.rel (%p11) target = $region8
  $region5: #{distilbert_forward.12} parent=0 // loop_body
    %s15 = ssub.s32 %s10, 1
    %s16 = ssub.s32 %s10, 2
    %s23 = sadd.s32 1, %s18
    %p24 = scmp.ge.s32.totalorder %s23, 4
    %s25 = scalar_select %p24, 0, %s23
    %s26 = sadd.s32 1, %s17
    %s27 = scalar_select %p24, %s26, %s17
    %p28 = scmp.ge.s32.totalorder %s27, 2
    %s29 = scalar_select %p28, 0, %s27
    %s30 = ssub.s32 %s17, %s29
    %s31 = ssub.s32 %s18, %s25
    %s32 = sor.u32 %s30, %s31
    %p33 = scmp.eq.s32.totalorder %s32, 0
    %s35 = sadd.s32 %s34, 1
    %s36 = scalar_select %p33, %s34, %s35
    %p39 = pneg %p33
    %p40 = scmp.eq.s32.totalorder %s10, 7
    %p41 = por %p39, %p40
    %p42 = scmp.ne.s32.totalorder %s34, %s37
    %p43 = scmp.eq.s32.totalorder %s10, 0
    %p44 = por %p42, %p43
    %p45 = scmp.ne.s32.totalorder %s34, %s37
    %p46 = scmp.eq.s32.totalorder %s15, 7
    %p47 = por %p45, %p46
    %p48 = scmp.ne.s32.totalorder %s37, %s38
    %p49 = scmp.eq.s32.totalorder %s15, 0
    %p50 = por %p48, %p49
    %p51 = scmp.ne.s32.totalorder %s37, %s38
    %p52 = scmp.eq.s32.totalorder %s16, 7
    %p53 = por %p51, %p52
    %p55 = scmp.ne.s32.totalorder %s38, %s54
    %p56 = scmp.eq.s32.totalorder %s16, 0
    %p57 = por %p55, %p56
    %s58 = ssub.s32 %s17, %s29
    %s59 = ssub.s32 %s18, %s25
    %s60 = sor.u32 %s58, %s59
    %p61 = scmp.eq.s32.totalorder %s60, 0
    %s63 = sadd.s32 %s62, 1
    %s64 = scalar_select %p61, %s62, %s63
    %p67 = pneg %p61
    %p68 = scmp.eq.s32.totalorder %s10, 7
    %p69 = por %p67, %p68
    %p70 = scmp.ne.s32.totalorder %s62, %s65
    %p71 = scmp.eq.s32.totalorder %s10, 0
    %p72 = por %p70, %p71
    %p73 = scmp.ne.s32.totalorder %s62, %s65
    %p74 = scmp.eq.s32.totalorder %s15, 7
    %p75 = por %p73, %p74
    %p76 = scmp.ne.s32.totalorder %s65, %s66
    %p77 = scmp.eq.s32.totalorder %s15, 0
    %p78 = por %p76, %p77
    %p79 = scmp.ne.s32.totalorder %s65, %s66
    %p80 = scmp.eq.s32.totalorder %s16, 7
    %p81 = por %p79, %p80
    %p83 = scmp.ne.s32.totalorder %s66, %s82
    %p84 = scmp.eq.s32.totalorder %s16, 0
    %p85 = por %p83, %p84
    %s86 = ssub.s32 %s17, %s29
    %s87 = ssub.s32 %s18, %s25
    %s88 = sor.u32 %s86, %s87
    %p89 = scmp.eq.s32.totalorder %s88, 0
    %s91 = sadd.s32 %s90, 1
    %s92 = scalar_select %p89, %s90, %s91
    %p95 = pneg %p89
    %p96 = scmp.eq.s32.totalorder %s10, 7
    %p97 = por %p95, %p96
    %p98 = scmp.ne.s32.totalorder %s90, %s93
    %p99 = scmp.eq.s32.totalorder %s10, 0
    %p100 = por %p98, %p99
    %p101 = scmp.ne.s32.totalorder %s90, %s93
    %p102 = scmp.eq.s32.totalorder %s15, 7
    %p103 = por %p101, %p102
    %p104 = scmp.ne.s32.totalorder %s93, %s94
    %p105 = scmp.eq.s32.totalorder %s15, 0
    %p106 = por %p104, %p105
    %p107 = scmp.ne.s32.totalorder %s93, %s94
    %p108 = scmp.eq.s32.totalorder %s16, 7
    %p109 = por %p107, %p108
    %p111 = scmp.ne.s32.totalorder %s94, %s110
    %p112 = scmp.eq.s32.totalorder %s16, 0
    %p113 = por %p111, %p112
    %s114 = ssub.s32 %s17, %s29
    %p115 = scmp.eq.s32.totalorder %s114, 0
    %s117 = sadd.s32 %s116, 1
    %s118 = scalar_select %p115, %s116, %s117
    %p121 = pneg %p115
    %p122 = scmp.eq.s32.totalorder %s10, 7
    %p123 = por %p121, %p122
    %p124 = scmp.ne.s32.totalorder %s116, %s119
    %p125 = scmp.eq.s32.totalorder %s10, 0
    %p126 = por %p124, %p125
    %p127 = scmp.ne.s32.totalorder %s116, %s119
    %p128 = scmp.eq.s32.totalorder %s15, 7
    %p129 = por %p127, %p128
    %p130 = scmp.ne.s32.totalorder %s119, %s120
    %p131 = scmp.eq.s32.totalorder %s15, 0
    %p132 = por %p130, %p131
    %p133 = scmp.ne.s32.totalorder %s119, %s120
    %p134 = scmp.eq.s32.totalorder %s16, 7
    %p135 = por %p133, %p134
    %p137 = scmp.ne.s32.totalorder %s120, %s136
    %p138 = scmp.eq.s32.totalorder %s16, 0
    %p139 = por %p137, %p138
    %s140 = ssub.s32 %s17, %s29
    %s141 = ssub.s32 %s18, %s25
    %s142 = sor.u32 %s140, %s141
    %p143 = scmp.eq.s32.totalorder %s142, 0
    %s145 = sadd.s32 %s144, 1
    %s146 = scalar_select %p143, %s144, %s145
    %p149 = pneg %p143
    %p150 = scmp.eq.s32.totalorder %s10, 7
    %p151 = por %p149, %p150
    %p152 = scmp.ne.s32.totalorder %s144, %s147
    %p153 = scmp.eq.s32.totalorder %s10, 0
    %p154 = por %p152, %p153
    %p155 = scmp.ne.s32.totalorder %s144, %s147
    %p156 = scmp.eq.s32.totalorder %s15, 7
    %p157 = por %p155, %p156
    %p158 = scmp.ne.s32.totalorder %s147, %s148
    %p159 = scmp.eq.s32.totalorder %s15, 0
    %p160 = por %p158, %p159
    %p161 = scmp.ne.s32.totalorder %s147, %s148
    %p162 = scmp.eq.s32.totalorder %s16, 7
    %p163 = por %p161, %p162
    %p165 = scmp.ne.s32.totalorder %s148, %s164
    %p166 = scmp.eq.s32.totalorder %s16, 0
    %p167 = por %p165, %p166
    %p168 = scmp.le.s32.totalorder 1, %s10
    %p169 = scmp.lt.s32.totalorder %s10, 9
    %p170 = pnand %p168, %p169
    %p171 = pneg %p170
    // Predicated region
    $region9: #{distilbert_forward.12} parent=5 // pred_check
      _
    $region10: #{distilbert_forward.12} parent=5 // pred_check_branch
      %173 = sbr.rel (%p170) target = $region12
    $region11: #{distilbert_forward.12} parent=5 // pred_region
      %s174 = ssub.s32 %s10, 1
    $region12: #{distilbert_forward.12} parent=5 // pred_fallthru
      _
    %p175 = scmp.lt.s32.totalorder %s10, 8
    // Predicated region
    $region13: #{distilbert_forward.12} parent=5 // pred_check
      %p176 = pneg %p175
    $region14: #{distilbert_forward.12} parent=5 // pred_check_branch
      %178 = sbr.rel (%p176) target = $region16
    $region15: #{distilbert_forward.12} parent=5 // pred_region
      // Predicated region
      $region17: #{distilbert_forward.12} parent=15 // pred_check
        %p179 = pneg %p44
      $region18: #{distilbert_forward.12} parent=15 // pred_check_branch
        %181 = sbr.rel (%p179) target = $region20
      $region19: #{distilbert_forward.12} parent=15 // pred_region
        %p182 = scmp.lt.s32.totalorder %s17, 1
        %s183 = scalar_select %p182, %s17, 1
        %p184 = scmp.lt.s32.totalorder %s18, 3
        %s185 = scalar_select %p184, %s18, 3
        %s186 = smul.addr %s183, 4
        %s187 = sadd.s32 %s185, %s186
        %s188 = smul.addr %s187, 4
        %s189 = scalar_lea.vmem %s0, %s188
      $region20: #{distilbert_forward.12} parent=15 // pred_fallthru
        _
      // Predicated region
      $region21: #{distilbert_forward.12} parent=15 // pred_check
        %p190 = pneg %p72
      $region22: #{distilbert_forward.12} parent=15 // pred_check_branch
        %192 = sbr.rel (%p190) target = $region24
      $region23: #{distilbert_forward.12} parent=15 // pred_region
        %p193 = scmp.lt.s32.totalorder %s17, 1
        %s194 = scalar_select %p193, %s17, 1
        %p195 = scmp.lt.s32.totalorder %s18, 3
        %s196 = scalar_select %p195, %s18, 3
        %s197 = smul.addr %s194, 4
        %s198 = sadd.s32 %s196, %s197
        %s199 = smul.addr %s198, 4
        %s200 = scalar_lea.vmem %s1, %s199
      $region24: #{distilbert_forward.12} parent=15 // pred_fallthru
        _
      // Predicated region
      $region25: #{distilbert_forward.12} parent=15 // pred_check
        %p201 = pneg %p100
      $region26: #{distilbert_forward.12} parent=15 // pred_check_branch
        %203 = sbr.rel (%p201) target = $region28
      $region27: #{distilbert_forward.12} parent=15 // pred_region
        %p204 = scmp.lt.s32.totalorder %s17, 1
        %s205 = scalar_select %p204, %s17, 1
        %p206 = scmp.lt.s32.totalorder %s18, 3
        %s207 = scalar_select %p206, %s18, 3
        %s208 = smul.addr %s205, 4
        %s209 = sadd.s32 %s207, %s208
        %s210 = smul.addr %s209, 4
        %s211 = scalar_lea.vmem %s2, %s210
      $region28: #{distilbert_forward.12} parent=15 // pred_fallthru
        _
      // Predicated region
      $region29: #{distilbert_forward.12} parent=15 // pred_check
        %p212 = pneg %p126
      $region30: #{distilbert_forward.12} parent=15 // pred_check_branch
        %214 = sbr.rel (%p212) target = $region32
      $region31: #{distilbert_forward.12} parent=15 // pred_region
        %p215 = scmp.lt.s32.totalorder %s17, 1
        %s216 = scalar_select %p215, %s17, 1
        %s217 = scalar_lea.vmem %s3, %s216
      $region32: #{distilbert_forward.12} parent=15 // pred_fallthru
        _
    $region16: #{distilbert_forward.12} parent=5 // pred_fallthru
      _
    %p218 = scmp.le.s32.totalorder 1, %s10
    %p219 = scmp.lt.s32.totalorder %s10, 9
    %p220 = pnand %p218, %p219
    %p221 = pneg %p220
    // Predicated region
    $region33: #{distilbert_forward.12} parent=5 // pred_check
      _
    $region34: #{distilbert_forward.12} parent=5 // pred_check_branch
      %223 = sbr.rel (%p220) target = $region36
    $region35: #{distilbert_forward.12} parent=5 // pred_region
      %s224 = ssub.s32 %s10, 1
      %p225 = scmp.lt.s32.totalorder %s19, 1
      %s226 = scalar_select %p225, %s19, 1
      %p227 = scmp.lt.s32.totalorder %s20, 3
      %s228 = scalar_select %p227, %s20, 3
      %s229 = smul.addr %s226, 4
      %s230 = sadd.s32 %s228, %s229
      %s231 = smul.addr %s230, 4
      %s232 = scalar_lea.vmem %s0, %s231
      %p233 = pneg %p50
      %p234 = pneg %p47
      %p235 = scmp.lt.s32.totalorder %s19, 1
      %s236 = scalar_select %p235, %s19, 1
      %p237 = scmp.lt.s32.totalorder %s20, 3
      %s238 = scalar_select %p237, %s20, 3
      %s239 = smul.addr %s236, 4
      %s240 = sadd.s32 %s238, %s239
      %s241 = smul.addr %s240, 4
      %s242 = scalar_lea.vmem %s1, %s241
      %p243 = pneg %p78
      %p244 = pneg %p75
      %p245 = scmp.lt.s32.totalorder %s19, 1
      %s246 = scalar_select %p245, %s19, 1
      %p247 = scmp.lt.s32.totalorder %s20, 3
      %s248 = scalar_select %p247, %s20, 3
      %s249 = smul.addr %s246, 4
      %s250 = sadd.s32 %s248, %s249
      %s251 = smul.addr %s250, 4
      %s252 = scalar_lea.vmem %s2, %s251
      %p253 = pneg %p106
      %p254 = pneg %p103
      %p255 = scmp.lt.s32.totalorder %s19, 1
      %s256 = scalar_select %p255, %s19, 1
      %s257 = scalar_lea.vmem %s3, %s256
      %p258 = pneg %p132
      %p259 = pneg %p129
      %p260 = pneg %p160
      %p261 = pneg %p157
      %p262 = scmp.lt.s32.totalorder %s19, 1
      %s263 = scalar_select %p262, %s19, 1
      %p264 = scmp.lt.s32.totalorder %s20, 3
      %s265 = scalar_select %p264, %s20, 3
      %s266 = smul.addr %s263, 4
      %s267 = sadd.s32 %s265, %s266
      %s268 = smul.addr %s267, 4
      %s269 = scalar_lea.vmem %s4, %s268
      %p270 = scmp.lt.s32.totalorder %s19, 1
      %s271 = scalar_select %p270, %s19, 1
      %p272 = scmp.lt.s32.totalorder %s20, 3
      %s273 = scalar_select %p272, %s20, 3
      %s274 = smul.addr %s271, 4
      %s275 = sadd.s32 %s273, %s274
      %s276 = smul.addr %s275, 4
      %s277 = scalar_lea.vmem %s0, %s276
      %p278 = scmp.lt.s32.totalorder %s19, 1
      %s279 = scalar_select %p278, %s19, 1
      %p280 = scmp.lt.s32.totalorder %s20, 3
      %s281 = scalar_select %p280, %s20, 3
      %s282 = smul.addr %s279, 4
      %s283 = sadd.s32 %s281, %s282
      %s284 = smul.addr %s283, 4
      %s285 = scalar_lea.vmem %s1, %s284
      %p286 = scmp.lt.s32.totalorder %s19, 1
      %s287 = scalar_select %p286, %s19, 1
      %p288 = scmp.lt.s32.totalorder %s20, 3
      %s289 = scalar_select %p288, %s20, 3
      %s290 = smul.addr %s287, 4
      %s291 = sadd.s32 %s289, %s290
      %s292 = smul.addr %s291, 4
      %s293 = scalar_lea.vmem %s2, %s292
      %p294 = scmp.lt.s32.totalorder %s19, 1
      %s295 = scalar_select %p294, %s19, 1
      %s296 = scalar_lea.vmem %s3, %s295
      %p297 = scmp.lt.s32.totalorder %s19, 1
      %s298 = scalar_select %p297, %s19, 1
      %p299 = scmp.lt.s32.totalorder %s20, 3
      %s300 = scalar_select %p299, %s20, 3
      %s301 = smul.addr %s298, 4
      %s302 = sadd.s32 %s300, %s301
      %s303 = smul.addr %s302, 4
      %s304 = scalar_lea.vmem %s4, %s303
      %v306 = vld [vmem:[%s277] sm:$0xf]
      %v307 = vld [vmem:[%s285] sm:$0xf]
      %v308 = vld [vmem:[%s293] sm:$0xf]
      %vm309 = vcmask 64512
      %v311 = vsel %vm309, %v306, 0
      %v314 = vsel %vm309, %v307, 0
      %316 = vmatprep.subr.bf16.mxu0 0
      %317 = vmatpush1.bf16.xpose.msra.mxu0 %v314
      %318 = vmatprep.subr.bf16.mxu0 0
      %319 = vmatpush1.bf16.xpose.msra.mxu0 0
      %320 = vmatprep.subr.bf16.mxu0 0
      %321 = vmatpush1.bf16.xpose.msra.mxu0 0
      %322 = vmatprep.subr.bf16.mxu0 0
      %323 = vmatpush1.bf16.xpose.msra.mxu0 0
      %324 = vmatprep.subr.bf16.mxu0 0
      %325 = vmatpush1.bf16.xpose.msra.mxu0 0
      %326 = vmatprep.subr.bf16.mxu0 0
      %327 = vmatpush1.bf16.xpose.msra.mxu0 0
      %328 = vmatprep.subr.bf16.mxu0 0
      %329 = vmatpush1.bf16.xpose.msra.mxu0 0
      %330 = vmatprep.subr.bf16.mxu0 0
      %331 = vmatpush1.bf16.xpose.msra.mxu0 0
      %332 = vmatprep.subr.bf16.mxu0 0
      %333 = vmatpush1.bf16.xpose.msra.mxu0 0
      %334 = vmatprep.subr.bf16.mxu0 0
      %335 = vmatpush1.bf16.xpose.msra.mxu0 0
      %336 = vmatprep.subr.bf16.mxu0 0
      %337 = vmatpush1.bf16.xpose.msra.mxu0 0
      %338 = vmatprep.subr.bf16.mxu0 0
      %339 = vmatpush1.bf16.xpose.msra.mxu0 0
      %340 = vmatprep.subr.bf16.mxu0 0
      %341 = vmatpush1.bf16.xpose.msra.mxu0 0
      %342 = vmatprep.subr.bf16.mxu0 0
      %343 = vmatpush1.bf16.xpose.msra.mxu0 0
      %344 = vmatprep.subr.bf16.mxu0 0
      %345 = vmatpush1.bf16.xpose.msra.mxu0 0
      %346 = vmatprep.subr.bf16.mxu0 0
      %347 = vmatpush1.bf16.xpose.msra.mxu0 0
      %348 = vmatprep.mubr.bf16.mxu0 0
      %349 = vmatmul.mubr.bf16.gmra.mrb[0].mxu0 %v311
      %v350 = vpop.f32.mrb[0].mxu0
      %v351 = vadd.f32 0.0, %v350
      %v352 = vpop.f32.mrb[0].mxu0
      %v353 = vpop.f32.mrb[0].mxu0
      %v354 = vpop.f32.mrb[0].mxu0
      %355 = vdwg.mxu0
      %v356 = vmul.f32 %v351, 0.35355338
      %v357 = vld [vmem:[%s296] sm:$0x1]
      %vm358 = vcmp.eq.f32.partialorder %v357, 0.0
      %v359 = vsel %vm358, 1, 0
      %v360 = vlaneseq
      %v361 = vshrl.u32 %v360, 7
      %v362 = vsub.s32 0, %v361
      %v363 = vrot.slane %v359, %v362
      %vm364 = vcmp.eq.s32.totalorder %v363, 1
      %v365 = vsel %vm364, -3.4028235e+38, %v356
      %v366 = vsel %vm309, %v365, -inf
      %367 = vmax.xlane.f32.xlu0 %v366
      %v368 = vpop.xlane.xlu0 %367
      %v369 = vsub.f32 %v365, %v368
      %v370 = vmul.f32 %v369, 1.442695
      %v371 = vpow.pop %v370
      %v372 = vsel %vm309, %v371, 0.0
      %373 = vadd.xlane.f32.xlu0 %v372
      %v374 = vpop.xlane.xlu0 %373
      %v375 = vrcp.pop %v374
      %v376 = vmul.f32 %v371, %v375
      %v377 = vpack.c.bf16 %v376, %v376
      %v379 = vsel %vm309, %v377, 0
      %vm381 = vcmask 1043456
      %v383 = vsel %vm381, %v308, 0
      %385 = vmatprep.subr.bf16.mxu0 0
      %386 = vmatpush1.bf16.msra.mxu0 %v383
      %387 = vmatprep.subr.bf16.mxu0 0
      %388 = vmatpush1.bf16.msra.mxu0 0
      %389 = vmatprep.subr.bf16.mxu0 0
      %390 = vmatpush1.bf16.msra.mxu0 0
      %391 = vmatprep.subr.bf16.mxu0 0
      %392 = vmatpush1.bf16.msra.mxu0 0
      %393 = vmatprep.subr.bf16.mxu0 0
      %394 = vmatpush1.bf16.msra.mxu0 0
      %395 = vmatprep.subr.bf16.mxu0 0
      %396 = vmatpush1.bf16.msra.mxu0 0
      %397 = vmatprep.subr.bf16.mxu0 0
      %398 = vmatpush1.bf16.msra.mxu0 0
      %399 = vmatprep.subr.bf16.mxu0 0
      %400 = vmatpush1.bf16.msra.mxu0 0
      %401 = vmatprep.subr.bf16.mxu0 0
      %402 = vmatpush1.bf16.msra.mxu0 0
      %403 = vmatprep.subr.bf16.mxu0 0
      %404 = vmatpush1.bf16.msra.mxu0 0
      %405 = vmatprep.subr.bf16.mxu0 0
      %406 = vmatpush1.bf16.msra.mxu0 0
      %407 = vmatprep.subr.bf16.mxu0 0
      %408 = vmatpush1.bf16.msra.mxu0 0
      %409 = vmatprep.subr.bf16.mxu0 0
      %410 = vmatpush1.bf16.msra.mxu0 0
      %411 = vmatprep.subr.bf16.mxu0 0
      %412 = vmatpush1.bf16.msra.mxu0 0
      %413 = vmatprep.subr.bf16.mxu0 0
      %414 = vmatpush1.bf16.msra.mxu0 0
      %415 = vmatprep.subr.bf16.mxu0 0
      %416 = vmatpush1.bf16.msra.mxu0 0
      %417 = vmatprep.mubr.bf16.mxu0 0
      %418 = vmatmul.mubr.bf16.gmra.mrb[0].mxu0 %v379
      %v419 = vpop.f32.mrb[0].mxu0
      %v420 = vadd.f32 0.0, %v419
      %v421 = vpop.f32.mrb[0].mxu0
      %v422 = vpop.f32.mrb[0].mxu0
      %v423 = vpop.f32.mrb[0].mxu0
      %424 = vdwg.mxu0
      %v425 = vpack.c.bf16 %v420, %v420
      %vm426 = vcmask 60416
      %427 = vst.msk [vmem:[%s304] sm:$0xf] %vm426, %v425
      %p428 = scmp.lt.s32.totalorder %s19, 1
      %s429 = scalar_select %p428, %s19, 1
      %p430 = scmp.lt.s32.totalorder %s20, 3
      %s431 = scalar_select %p430, %s20, 3
      %s432 = smul.addr %s429, 4
      %s433 = sadd.s32 %s431, %s432
      %s434 = smul.addr %s433, 4
      %s435 = scalar_lea.vmem %s4, %s434
      // Predicated region
      $region37: #{distilbert_forward.12} parent=35 // pred_check
        %p436 = pneg %p157
      $region38: #{distilbert_forward.12} parent=35 // pred_check_branch
        %438 = sbr.rel (%p436) target = $region40
      $region39: #{distilbert_forward.12} parent=35 // pred_region
        _
      $region40: #{distilbert_forward.12} parent=35 // pred_fallthru
        _
    $region36: #{distilbert_forward.12} parent=5 // pred_fallthru
      _
    %p439 = scmp.le.s32.totalorder 2, %s10
    // Predicated region
    $region41: #{distilbert_forward.12} parent=5 // pred_check
      %p440 = pneg %p439
    $region42: #{distilbert_forward.12} parent=5 // pred_check_branch
      %442 = sbr.rel (%p440) target = $region44
    $region43: #{distilbert_forward.12} parent=5 // pred_region
      %s443 = ssub.s32 %s10, 2
      // Predicated region
      $region45: #{distilbert_forward.12} parent=43 // pred_check
        %p444 = pneg %p163
      $region46: #{distilbert_forward.12} parent=43 // pred_check_branch
        %446 = sbr.rel (%p444) target = $region48
      $region47: #{distilbert_forward.12} parent=43 // pred_region
        %p447 = scmp.lt.s32.totalorder %s21, 1
        %s448 = scalar_select %p447, %s21, 1
        %p449 = scmp.lt.s32.totalorder %s22, 3
        %s450 = scalar_select %p449, %s22, 3
        %s451 = smul.addr %s448, 4
        %s452 = sadd.s32 %s450, %s451
        %s453 = smul.addr %s452, 4
        %s454 = scalar_lea.vmem %s4, %s453
      $region48: #{distilbert_forward.12} parent=43 // pred_fallthru
        _
    $region44: #{distilbert_forward.12} parent=5 // pred_fallthru
      _
  $region6: #{distilbert_forward.12} parent=0 // loop_footer
    %s14 = sadd.s32 1, %s10
  $region7: #{distilbert_forward.12} parent=0 // loop_footer_branch
    %9 = sbr.rel target = $region3
  $region8: #{distilbert_forward.12} parent=0 // loop_exit
    _

// kernel: distilbert_forward.10
$region0: #{distilbert_forward.10}
  #allocation0 [shape = 'u32[]', space=smem, size = 0x4, offset = 0x4, fixed_abs, tag = 'smem constant byte address 0x4 - core index']
  #allocation1 [shape = 'u32[144,128]{1,0:T(1,128)}', space=vmem, size = 0x12000, scoped, tag = 'internal scratch']
  %s0 = inlined_call_operand.vmem [shape: bf16[16,32], index: 0, kind: input, shape index: {}]
  %s1 = inlined_call_operand.vmem [shape: bf16[16,32], index: 1, kind: input, shape index: {}]
  %s2 = inlined_call_operand.vmem [shape: f32[1,32], index: 2, kind: input, shape index: {}]
  %s3 = inlined_call_operand.vmem [shape: f32[1,32], index: 3, kind: input, shape index: {}]
  %s4 = inlined_call_operand.vmem [shape: bf16[16,32], index: 4, kind: output, shape index: {}]
  %s5 = sld [smem:[#allocation0]]
  $region26: #{distilbert_forward.10} parent=0
    _
  %s7 = ssub.s32 1, %s5
  %s8 = scalar_select 0, %s7, %s5
  // Predicated region
  $region2: #{distilbert_forward.10} parent=0 // pred_check
    _
  $region3: #{distilbert_forward.10} parent=0 // pred_check_branch
    %10 = sbr.rel (0) target = $region5
  $region4: #{distilbert_forward.10} parent=0 // pred_region
    _
  $region5: #{distilbert_forward.10} parent=0 // pred_fallthru
    _
  // Predicated region
  $region6: #{distilbert_forward.10} parent=0 // pred_check
    _
  $region7: #{distilbert_forward.10} parent=0 // pred_check_branch
    %12 = sbr.rel (0) target = $region9
  $region8: #{distilbert_forward.10} parent=0 // pred_region
    _
  $region9: #{distilbert_forward.10} parent=0 // pred_fallthru
    _
  // Predicated region
  $region10: #{distilbert_forward.10} parent=0 // pred_check
    _
  $region11: #{distilbert_forward.10} parent=0 // pred_check_branch
    %14 = sbr.rel (0) target = $region13
  $region12: #{distilbert_forward.10} parent=0 // pred_region
    _
  $region13: #{distilbert_forward.10} parent=0 // pred_fallthru
    _
  // Predicated region
  $region14: #{distilbert_forward.10} parent=0 // pred_check
    _
  $region15: #{distilbert_forward.10} parent=0 // pred_check_branch
    %16 = sbr.rel (0) target = $region17
  $region16: #{distilbert_forward.10} parent=0 // pred_region
    _
  $region17: #{distilbert_forward.10} parent=0 // pred_fallthru
    _
  %v17 = vld [vmem:[%s0] sm:$0xf]
  %v18 = vld [vmem:[%s0 + $0x4] sm:$0xf]
  %v19 = vunpack.c.l.bf16 %v17
  %v20 = vunpack.c.l.bf16 %v18
  %v21 = vld [vmem:[%s1] sm:$0xf]
  %v22 = vld [vmem:[%s1 + $0x4] sm:$0xf]
  %v23 = vunpack.c.l.bf16 %v21
  %v24 = vunpack.c.l.bf16 %v22
  %v25 = vadd.f32 %v19, %v23
  %v26 = vadd.f32 %v20, %v24
  %vm27 = vcmask 261120
  %v28 = vsel %vm27, %v25, 0.0
  %29 = vadd.xlane.f32.xlu0 %v28
  %v30 = vpop.xlane.xlu0 %29
  %v31 = vsel %vm27, %v26, 0.0
  %32 = vadd.xlane.f32.xlu0 %v31
  %v33 = vpop.xlane.xlu0 %32
  %v34 = vrcp.pop 32.0
  %v35 = vmul.f32 %v30, %v34
  %v36 = vmul.f32 %v33, %v34
  %v37 = vsub.f32 %v25, %v35
  %v38 = vsub.f32 %v26, %v36
  %v39 = vmul.f32 %v37, %v37
  %v40 = vmul.f32 %v38, %v38
  %v41 = vsel %vm27, %v39, 0.0
  %42 = vadd.xlane.f32.xlu0 %v41
  %v43 = vpop.xlane.xlu0 %42
  %v44 = vsel %vm27, %v40, 0.0
  %45 = vadd.xlane.f32.xlu0 %v44
  %v46 = vpop.xlane.xlu0 %45
  %v47 = vmul.f32 %v43, %v34
  %v48 = vmul.f32 %v46, %v34
  %v49 = vadd.f32 %v47, 1e-12
  %v50 = vadd.f32 %v48, 1e-12
  %v51 = vrsqrt.pop %v49
  %v52 = vrsqrt.pop %v50
  %v53 = vmul.f32 %v37, %v51
  %v54 = vmul.f32 %v38, %v52
  %v55 = vld [vmem:[%s2] sm:$0x1]
  %v57 = vlaneseq
  %v58 = vshrl.u32 %v57, 7
  %v59 = vsub.s32 0, %v58
  %v60 = vrot.slane %v55, %v59
  %v62 = vmul.f32 %v53, %v60
  %v63 = vmul.f32 %v54, %v60
  %v64 = vld [vmem:[%s3] sm:$0x1]
  %v66 = vlaneseq
  %v67 = vshrl.u32 %v66, 7
  %v68 = vsub.s32 0, %v67
  %v69 = vrot.slane %v64, %v68
  %v71 = vadd.f32 %v62, %v69
  %v72 = vadd.f32 %v63, %v69
  %v73 = vpack.c.bf16 %v72, %v71
  %v75 = vunpack.c.l.b16 %v73
  %v76 = vunpack.c.h.b16 %v73
  %v77 = vpack.c.b16 %v75, %v75
  %v78 = vpack.c.b16 %v76, %v76
  %vm81 = vcmask 257024
  %82 = vst.msk [vmem:[%s4] sm:$0xf] %vm81, %v77
  %83 = vst.msk [vmem:[%s4 + $0x4] sm:$0xf] %vm81, %v78
  // Predicated region
  $region18: #{distilbert_forward.10} parent=0 // pred_check
    _
  $region19: #{distilbert_forward.10} parent=0 // pred_check_branch
    %85 = sbr.rel (0) target = $region21
  $region20: #{distilbert_forward.10} parent=0 // pred_region
    _
  $region21: #{distilbert_forward.10} parent=0 // pred_fallthru
    _
  // Predicated region
  $region22: #{distilbert_forward.10} parent=0 // pred_check
    _
  $region23: #{distilbert_forward.10} parent=0 // pred_check_branch
    %87 = sbr.rel (0) target = $region25
  $region24: #{distilbert_forward.10} parent=0 // pred_region
    _
  $region25: #{distilbert_forward.10} parent=0 // pred_fallthru
    _

// kernel: distilbert_forward.13
$region0: #{distilbert_forward.13}
  #allocation0 [shape = 'u32[]', space=smem, size = 0x4, offset = 0x4, fixed_abs, tag = 'smem constant byte address 0x4 - core index']
  #allocation1 [shape = 'u32[144,128]{1,0:T(1,128)}', space=vmem, size = 0x12000, scoped, tag = 'internal scratch']
  #allocation2 [shape = 'f32[16,32]{1,0:T(8,128)}', space=vmem, size = 0x2000, scoped, tag = 'scratch operand']
  %s0 = inlined_call_operand.vmem [shape: bf16[16,32], index: 0, kind: input, shape index: {}]
  %s1 = inlined_call_operand.vmem [shape: bf16[32,32], index: 1, kind: input, shape index: {}]
  %s2 = inlined_call_operand.vmem [shape: f32[1,32], index: 2, kind: input, shape index: {}]
  %s3 = inlined_call_operand.vmem [shape: bf16[16,32], index: 3, kind: input, shape index: {}]
  %s4 = inlined_call_operand.vmem [shape: f32[1,32], index: 4, kind: input, shape index: {}]
  %s5 = inlined_call_operand.vmem [shape: f32[1,32], index: 5, kind: input, shape index: {}]
  %s6 = inlined_call_operand.vmem [shape: bf16[16,32], index: 6, kind: output, shape index: {}]
  %s7 = sld [smem:[#allocation0]]
  $region42: #{distilbert_forward.13} parent=0
    _
  %s9 = ssub.s32 1, %s7
  %s10 = scalar_select 0, %s9, %s7
  // Predicated region
  $region2: #{distilbert_forward.13} parent=0 // pred_check
    _
  $region3: #{distilbert_forward.13} parent=0 // pred_check_branch
    %12 = sbr.rel (0) target = $region5
  $region4: #{distilbert_forward.13} parent=0 // pred_region
    _
  $region5: #{distilbert_forward.13} parent=0 // pred_fallthru
    _
  // Predicated region
  $region6: #{distilbert_forward.13} parent=0 // pred_check
    _
  $region7: #{distilbert_forward.13} parent=0 // pred_check_branch
    %14 = sbr.rel (0) target = $region9
  $region8: #{distilbert_forward.13} parent=0 // pred_region
    _
  $region9: #{distilbert_forward.13} parent=0 // pred_fallthru
    _
  // Predicated region
  $region10: #{distilbert_forward.13} parent=0 // pred_check
    _
  $region11: #{distilbert_forward.13} parent=0 // pred_check_branch
    %16 = sbr.rel (0) target = $region13
  $region12: #{distilbert_forward.13} parent=0 // pred_region
    _
  $region13: #{distilbert_forward.13} parent=0 // pred_fallthru
    _
  // Predicated region
  $region14: #{distilbert_forward.13} parent=0 // pred_check
    _
  $region15: #{distilbert_forward.13} parent=0 // pred_check_branch
    %18 = sbr.rel (0) target = $region17
  $region16: #{distilbert_forward.13} parent=0 // pred_region
    _
  $region17: #{distilbert_forward.13} parent=0 // pred_fallthru
    _
  // Predicated region
  $region18: #{distilbert_forward.13} parent=0 // pred_check
    _
  $region19: #{distilbert_forward.13} parent=0 // pred_check_branch
    %20 = sbr.rel (0) target = $region21
  $region20: #{distilbert_forward.13} parent=0 // pred_region
    _
  $region21: #{distilbert_forward.13} parent=0 // pred_fallthru
    _
  // Predicated region
  $region22: #{distilbert_forward.13} parent=0 // pred_check
    _
  $region23: #{distilbert_forward.13} parent=0 // pred_check_branch
    %22 = sbr.rel (0) target = $region25
  $region24: #{distilbert_forward.13} parent=0 // pred_region
    _
  $region25: #{distilbert_forward.13} parent=0 // pred_fallthru
    _
  %p24 = scmp.eq.s32.totalorder 0, 0
  // Predicated region
  $region26: #{distilbert_forward.13} parent=0 // pred_check
    %p25 = pneg %p24
  $region27: #{distilbert_forward.13} parent=0 // pred_check_branch
    %27 = sbr.rel (%p25) target = $region29
  $region28: #{distilbert_forward.13} parent=0 // pred_region
    %vm28 = vcmask 261120
    %29 = vst.msk [vmem:[#allocation2] sm:$0xff] %vm28, 0.0
    %30 = vst.msk [vmem:[#allocation2 + $0x8] sm:$0xff] %vm28, 0.0
  $region29: #{distilbert_forward.13} parent=0 // pred_fallthru
    _
  %v31 = vld [vmem:[#allocation2] sm:$0xff]
  %v32 = vld [vmem:[#allocation2 + $0x8] sm:$0xff]
  %v33 = vld [vmem:[%s0] sm:$0xf]
  %v34 = vld [vmem:[%s0 + $0x4] sm:$0xf]
  %v35 = vld [vmem:[%s1] sm:$0xf]
  %v36 = vld [vmem:[%s1 + $0x4] sm:$0xf]
  %v37 = vld [vmem:[%s1 + $0x8] sm:$0xf]
  %v38 = vld [vmem:[%s1 + $0xc] sm:$0xf]
  %v41 = vunpack.c.l.b16 %v33
  %v42 = vunpack.c.l.b16 %v34
  %v43 = vpack.c.b16 %v42, %v41
  %v48 = vunpack.c.l.b16 %v35
  %v49 = vunpack.c.l.b16 %v36
  %v50 = vunpack.c.l.b16 %v37
  %v51 = vunpack.c.l.b16 %v38
  %v52 = vpack.c.b16 %v49, %v48
  %v53 = vpack.c.b16 %v51, %v50
  %vm56 = vcmask 261120
  %v58 = vsel %vm56, %v43, 0
  %60 = vmatprep.subr.bf16.mxu0 0
  %61 = vmatpush1.bf16.msra.mxu0 %v52
  %62 = vmatprep.subr.bf16.mxu0 0
  %63 = vmatpush1.bf16.msra.mxu0 %v53
  %64 = vmatprep.subr.bf16.mxu0 0
  %65 = vmatpush1.bf16.msra.mxu0 0
  %66 = vmatprep.subr.bf16.mxu0 0
  %67 = vmatpush1.bf16.msra.mxu0 0
  %68 = vmatprep.subr.bf16.mxu0 0
  %69 = vmatpush1.bf16.msra.mxu0 0
  %70 = vmatprep.subr.bf16.mxu0 0
  %71 = vmatpush1.bf16.msra.mxu0 0
  %72 = vmatprep.subr.bf16.mxu0 0
  %73 = vmatpush1.bf16.msra.mxu0 0
  %74 = vmatprep.subr.bf16.mxu0 0
  %75 = vmatpush1.bf16.msra.mxu0 0
  %76 = vmatprep.subr.bf16.mxu0 0
  %77 = vmatpush1.bf16.msra.mxu0 0
  %78 = vmatprep.subr.bf16.mxu0 0
  %79 = vmatpush1.bf16.msra.mxu0 0
  %80 = vmatprep.subr.bf16.mxu0 0
  %81 = vmatpush1.bf16.msra.mxu0 0
  %82 = vmatprep.subr.bf16.mxu0 0
  %83 = vmatpush1.bf16.msra.mxu0 0
  %84 = vmatprep.subr.bf16.mxu0 0
  %85 = vmatpush1.bf16.msra.mxu0 0
  %86 = vmatprep.subr.bf16.mxu0 0
  %87 = vmatpush1.bf16.msra.mxu0 0
  %88 = vmatprep.subr.bf16.mxu0 0
  %89 = vmatpush1.bf16.msra.mxu0 0
  %90 = vmatprep.subr.bf16.mxu0 0
  %91 = vmatpush1.bf16.msra.mxu0 0
  %92 = vmatprep.mubr.bf16.mxu0 0
  %93 = vmatmul.mubr.bf16.gmra.mrb[0].mxu0 %v58
  %v94 = vpop.f32.mrb[0].mxu0
  %v95 = vadd.f32 0.0, %v94
  %v96 = vpop.f32.mrb[0].mxu0
  %v97 = vpop.f32.mrb[0].mxu0
  %v98 = vadd.f32 0.0, %v97
  %v99 = vpop.f32.mrb[0].mxu0
  %100 = vdwg.mxu0
  %v101 = vadd.f32 %v31, %v95
  %v102 = vadd.f32 %v32, %v98
  %103 = vst.msk [vmem:[#allocation2] sm:$0xff] %vm56, %v101
  %104 = vst.msk [vmem:[#allocation2 + $0x8] sm:$0xff] %vm56, %v102
  // Predicated region
  $region30: #{distilbert_forward.13} parent=0 // pred_check
    %p105 = pneg %p24
  $region31: #{distilbert_forward.13} parent=0 // pred_check_branch
    %107 = sbr.rel (%p105) target = $region33
  $region32: #{distilbert_forward.13} parent=0 // pred_region
    %v108 = vld [vmem:[#allocation2] sm:$0xff]
    %v109 = vld [vmem:[#allocation2 + $0x8] sm:$0xff]
    %v110 = vld [vmem:[%s2] sm:$0x1]
    %v112 = vlaneseq
    %v113 = vshrl.u32 %v112, 7
    %v114 = vsub.s32 0, %v113
    %v115 = vrot.slane %v110, %v114
    %v117 = vadd.f32 %v108, %v115
    %v118 = vadd.f32 %v109, %v115
    %v119 = vld [vmem:[%s3] sm:$0xf]
    %v120 = vld [vmem:[%s3 + $0x4] sm:$0xf]
    %v121 = vunpack.c.l.bf16 %v119
    %v122 = vunpack.c.l.bf16 %v120
    %v123 = vadd.f32 %v117, %v121
    %v124 = vadd.f32 %v118, %v122
    %v125 = vsel %vm56, %v123, 0.0
    %126 = vadd.xlane.f32.xlu0 %v125
    %v127 = vpop.xlane.xlu0 %126
    %v128 = vsel %vm56, %v124, 0.0
    %129 = vadd.xlane.f32.xlu0 %v128
    %v130 = vpop.xlane.xlu0 %129
    %v131 = vrcp.pop 32.0
    %v132 = vmul.f32 %v127, %v131
    %v133 = vmul.f32 %v130, %v131
    %v134 = vsub.f32 %v123, %v132
    %v135 = vsub.f32 %v124, %v133
    %v136 = vmul.f32 %v134, %v134
    %v137 = vmul.f32 %v135, %v135
    %v138 = vsel %vm56, %v136, 0.0
    %139 = vadd.xlane.f32.xlu0 %v138
    %v140 = vpop.xlane.xlu0 %139
    %v141 = vsel %vm56, %v137, 0.0
    %142 = vadd.xlane.f32.xlu0 %v141
    %v143 = vpop.xlane.xlu0 %142
    %v144 = vmul.f32 %v140, %v131
    %v145 = vmul.f32 %v143, %v131
    %v146 = vadd.f32 %v144, 1e-12
    %v147 = vadd.f32 %v145, 1e-12
    %v148 = vrsqrt.pop %v146
    %v149 = vrsqrt.pop %v147
    %v150 = vmul.f32 %v134, %v148
    %v151 = vmul.f32 %v135, %v149
    %v152 = vld [vmem:[%s4] sm:$0x1]
    %v154 = vlaneseq
    %v155 = vshrl.u32 %v154, 7
    %v156 = vsub.s32 0, %v155
    %v157 = vrot.slane %v152, %v156
    %v159 = vmul.f32 %v150, %v157
    %v160 = vmul.f32 %v151, %v157
    %v161 = vld [vmem:[%s5] sm:$0x1]
    %v163 = vlaneseq
    %v164 = vshrl.u32 %v163, 7
    %v165 = vsub.s32 0, %v164
    %v166 = vrot.slane %v161, %v165
    %v168 = vadd.f32 %v159, %v166
    %v169 = vadd.f32 %v160, %v166
    %v170 = vpack.c.bf16 %v169, %v168
    %v172 = vunpack.c.l.b16 %v170
    %v173 = vunpack.c.h.b16 %v170
    %v174 = vpack.c.b16 %v172, %v172
    %v175 = vpack.c.b16 %v173, %v173
    %vm178 = vcmask 257024
    %179 = vst.msk [vmem:[%s6] sm:$0xf] %vm178, %v174
    %180 = vst.msk [vmem:[%s6 + $0x4] sm:$0xf] %vm178, %v175
  $region33: #{distilbert_forward.13} parent=0 // pred_fallthru
    _
  // Predicated region
  $region34: #{distilbert_forward.13} parent=0 // pred_check
    _
  $region35: #{distilbert_forward.13} parent=0 // pred_check_branch
    %182 = sbr.rel (0) target = $region37
  $region36: #{distilbert_forward.13} parent=0 // pred_region
    _
  $region37: #{distilbert_forward.13} parent=0 // pred_fallthru
    _
  // Predicated region
  $region38: #{distilbert_forward.13} parent=0 // pred_check
    _
  $region39: #{distilbert_forward.13} parent=0 // pred_check_branch
    %184 = sbr.rel (0) target = $region41
  $region40: #{distilbert_forward.13} parent=0 // pred_region
    _
  $region41: #{distilbert_forward.13} parent=0 // pred_fallthru
    _

// kernel: distilbert_forward.14
$region0: #{distilbert_forward.14}
  #allocation0 [shape = 'u32[]', space=smem, size = 0x4, offset = 0x4, fixed_abs, tag = 'smem constant byte address 0x4 - core index']
  #allocation1 [shape = 'u32[144,128]{1,0:T(1,128)}', space=vmem, size = 0x12000, scoped, tag = 'internal scratch']
  #allocation2 [shape = 'f32[16,32]{1,0:T(8,128)}', space=vmem, size = 0x2000, scoped, tag = 'scratch operand']
  %s0 = inlined_call_operand.vmem [shape: bf16[16,32], index: 0, kind: input, shape index: {}]
  %s1 = inlined_call_operand.vmem [shape: bf16[32,64], index: 1, kind: input, shape index: {}]
  %s2 = inlined_call_operand.vmem [shape: f32[1,64], index: 2, kind: input, shape index: {}]
  %s3 = inlined_call_operand.vmem [shape: bf16[64,32], index: 3, kind: input, shape index: {}]
  %s4 = inlined_call_operand.vmem [shape: f32[1,32], index: 4, kind: input, shape index: {}]
  %s5 = inlined_call_operand.vmem [shape: f32[1,32], index: 5, kind: input, shape index: {}]
  %s6 = inlined_call_operand.vmem [shape: f32[1,32], index: 6, kind: input, shape index: {}]
  %s7 = inlined_call_operand.vmem [shape: bf16[16,32], index: 7, kind: output, shape index: {}]
  %s8 = sld [smem:[#allocation0]]
  $region46: #{distilbert_forward.14} parent=0
    _
  %s10 = ssub.s32 1, %s8
  %s11 = scalar_select 0, %s10, %s8
  // Predicated region
  $region2: #{distilbert_forward.14} parent=0 // pred_check
    _
  $region3: #{distilbert_forward.14} parent=0 // pred_check_branch
    %13 = sbr.rel (0) target = $region5
  $region4: #{distilbert_forward.14} parent=0 // pred_region
    _
  $region5: #{distilbert_forward.14} parent=0 // pred_fallthru
    _
  // Predicated region
  $region6: #{distilbert_forward.14} parent=0 // pred_check
    _
  $region7: #{distilbert_forward.14} parent=0 // pred_check_branch
    %15 = sbr.rel (0) target = $region9
  $region8: #{distilbert_forward.14} parent=0 // pred_region
    _
  $region9: #{distilbert_forward.14} parent=0 // pred_fallthru
    _
  // Predicated region
  $region10: #{distilbert_forward.14} parent=0 // pred_check
    _
  $region11: #{distilbert_forward.14} parent=0 // pred_check_branch
    %17 = sbr.rel (0) target = $region13
  $region12: #{distilbert_forward.14} parent=0 // pred_region
    _
  $region13: #{distilbert_forward.14} parent=0 // pred_fallthru
    _
  // Predicated region
  $region14: #{distilbert_forward.14} parent=0 // pred_check
    _
  $region15: #{distilbert_forward.14} parent=0 // pred_check_branch
    %19 = sbr.rel (0) target = $region17
  $region16: #{distilbert_forward.14} parent=0 // pred_region
    _
  $region17: #{distilbert_forward.14} parent=0 // pred_fallthru
    _
  // Predicated region
  $region18: #{distilbert_forward.14} parent=0 // pred_check
    _
  $region19: #{distilbert_forward.14} parent=0 // pred_check_branch
    %21 = sbr.rel (0) target = $region21
  $region20: #{distilbert_forward.14} parent=0 // pred_region
    _
  $region21: #{distilbert_forward.14} parent=0 // pred_fallthru
    _
  // Predicated region
  $region22: #{distilbert_forward.14} parent=0 // pred_check
    _
  $region23: #{distilbert_forward.14} parent=0 // pred_check_branch
    %23 = sbr.rel (0) target = $region25
  $region24: #{distilbert_forward.14} parent=0 // pred_region
    _
  $region25: #{distilbert_forward.14} parent=0 // pred_fallthru
    _
  // Predicated region
  $region26: #{distilbert_forward.14} parent=0 // pred_check
    _
  $region27: #{distilbert_forward.14} parent=0 // pred_check_branch
    %25 = sbr.rel (0) target = $region29
  $region28: #{distilbert_forward.14} parent=0 // pred_region
    _
  $region29: #{distilbert_forward.14} parent=0 // pred_fallthru
    _
  %p27 = scmp.eq.s32.totalorder 0, 0
  // Predicated region
  $region30: #{distilbert_forward.14} parent=0 // pred_check
    %p28 = pneg %p27
  $region31: #{distilbert_forward.14} parent=0 // pred_check_branch
    %30 = sbr.rel (%p28) target = $region33
  $region32: #{distilbert_forward.14} parent=0 // pred_region
    %vm31 = vcmask 261120
    %32 = vst.msk [vmem:[#allocation2] sm:$0xff] %vm31, 0.0
    %33 = vst.msk [vmem:[#allocation2 + $0x8] sm:$0xff] %vm31, 0.0
  $region33: #{distilbert_forward.14} parent=0 // pred_fallthru
    _
  %v34 = vld [vmem:[%s0] sm:$0xf]
  %v35 = vld [vmem:[%s0 + $0x4] sm:$0xf]
  %v36 = vld [vmem:[%s1] sm:$0xf]
  %v37 = vld [vmem:[%s1 + $0x4] sm:$0xf]
  %v38 = vld [vmem:[%s1 + $0x8] sm:$0xf]
  %v39 = vld [vmem:[%s1 + $0xc] sm:$0xf]
  %v40 = vld [vmem:[%s2] sm:$0x1]
  %v42 = vlaneseq
  %v43 = vshrl.u32 %v42, 7
  %v44 = vsub.s32 0, %v43
  %v45 = vrot.slane %v40, %v44
  %v49 = vunpack.c.l.b16 %v34
  %v50 = vunpack.c.l.b16 %v35
  %v51 = vpack.c.b16 %v50, %v49
  %v56 = vunpack.c.l.b16 %v36
  %v57 = vunpack.c.l.b16 %v37
  %v58 = vunpack.c.l.b16 %v38
  %v59 = vunpack.c.l.b16 %v39
  %v60 = vpack.c.b16 %v57, %v56
  %v61 = vpack.c.b16 %v59, %v58
  %vm64 = vcmask 261120
  %v66 = vsel %vm64, %v51, 0
  %68 = vmatprep.subr.bf16.mxu0 0
  %69 = vmatpush1.bf16.msra.mxu0 %v60
  %70 = vmatprep.subr.bf16.mxu0 0
  %71 = vmatpush1.bf16.msra.mxu0 %v61
  %72 = vmatprep.subr.bf16.mxu0 0
  %73 = vmatpush1.bf16.msra.mxu0 0
  %74 = vmatprep.subr.bf16.mxu0 0
  %75 = vmatpush1.bf16.msra.mxu0 0
  %76 = vmatprep.subr.bf16.mxu0 0
  %77 = vmatpush1.bf16.msra.mxu0 0
  %78 = vmatprep.subr.bf16.mxu0 0
  %79 = vmatpush1.bf16.msra.mxu0 0
  %80 = vmatprep.subr.bf16.mxu0 0
  %81 = vmatpush1.bf16.msra.mxu0 0
  %82 = vmatprep.subr.bf16.mxu0 0
  %83 = vmatpush1.bf16.msra.mxu0 0
  %84 = vmatprep.subr.bf16.mxu0 0
  %85 = vmatpush1.bf16.msra.mxu0 0
  %86 = vmatprep.subr.bf16.mxu0 0
  %87 = vmatpush1.bf16.msra.mxu0 0
  %88 = vmatprep.subr.bf16.mxu0 0
  %89 = vmatpush1.bf16.msra.mxu0 0
  %90 = vmatprep.subr.bf16.mxu0 0
  %91 = vmatpush1.bf16.msra.mxu0 0
  %92 = vmatprep.subr.bf16.mxu0 0
  %93 = vmatpush1.bf16.msra.mxu0 0
  %94 = vmatprep.subr.bf16.mxu0 0
  %95 = vmatpush1.bf16.msra.mxu0 0
  %96 = vmatprep.subr.bf16.mxu0 0
  %97 = vmatpush1.bf16.msra.mxu0 0
  %98 = vmatprep.subr.bf16.mxu0 0
  %99 = vmatpush1.bf16.msra.mxu0 0
  %100 = vmatprep.mubr.bf16.mxu0 0
  %101 = vmatmul.mubr.bf16.gmra.mrb[0].mxu0 %v66
  %v102 = vpop.f32.mrb[0].mxu0
  %v103 = vadd.f32 %v45, %v102
  %v104 = vpop.f32.mrb[0].mxu0
  %v105 = vpop.f32.mrb[0].mxu0
  %v106 = vadd.f32 %v45, %v105
  %v107 = vpop.f32.mrb[0].mxu0
  %108 = vdwg.mxu0
  %v109 = vmul.f32 %v103, 0.5
  %v110 = vmul.f32 %v106, 0.5
  %v111 = vmul.f32 %v103, 0.044715
  %v112 = vmul.f32 %v106, 0.044715
  %v113 = vmul.f32 %v111, %v103
  %v114 = vmul.f32 %v112, %v106
  %v115 = vmul.f32 %v113, %v103
  %v116 = vmul.f32 %v114, %v106
  %v117 = vadd.f32 %v103, %v115
  %v118 = vadd.f32 %v106, %v116
  %v119 = vmul.f32 %v117, 0.7978846
  %v120 = vmul.f32 %v118, 0.7978846
  %v121 = vtanh.pop %v119
  %v122 = vtanh.pop %v120
  %v123 = vadd.f32 %v121, 1.0
  %v124 = vadd.f32 %v122, 1.0
  %v125 = vmul.f32 %v109, %v123
  %v126 = vmul.f32 %v110, %v124
  %v127 = vld [vmem:[#allocation2] sm:$0xff]
  %v128 = vld [vmem:[#allocation2 + $0x8] sm:$0xff]
  %v129 = vpack.c.bf16 %v126, %v125
  %v130 = vld [vmem:[%s3] sm:$0xf]
  %v131 = vld [vmem:[%s3 + $0x4] sm:$0xf]
  %v132 = vld [vmem:[%s3 + $0x8] sm:$0xf]
  %v133 = vld [vmem:[%s3 + $0xc] sm:$0xf]
  %v134 = vld [vmem:[%s3 + $0x10] sm:$0xf]
  %v135 = vld [vmem:[%s3 + $0x14] sm:$0xf]
  %v136 = vld [vmem:[%s3 + $0x18] sm:$0xf]
  %v137 = vld [vmem:[%s3 + $0x1c] sm:$0xf]
  %v146 = vunpack.c.l.b16 %v130
  %v147 = vunpack.c.l.b16 %v131
  %v148 = vunpack.c.l.b16 %v132
  %v149 = vunpack.c.l.b16 %v133
  %v150 = vunpack.c.l.b16 %v134
  %v151 = vunpack.c.l.b16 %v135
  %v152 = vunpack.c.l.b16 %v136
  %v153 = vunpack.c.l.b16 %v137
  %v154 = vpack.c.b16 %v147, %v146
  %v155 = vpack.c.b16 %v149, %v148
  %v156 = vpack.c.b16 %v151, %v150
  %v157 = vpack.c.b16 %v153, %v152
  %vm162 = vcmask 523264
  %v164 = vsel %vm162, %v129, 0
  %166 = vmatprep.subr.bf16.mxu0 0
  %167 = vmatpush1.bf16.msra.mxu0 %v154
  %168 = vmatprep.subr.bf16.mxu0 0
  %169 = vmatpush1.bf16.msra.mxu0 %v155
  %170 = vmatprep.subr.bf16.mxu0 0
  %171 = vmatpush1.bf16.msra.mxu0 %v156
  %172 = vmatprep.subr.bf16.mxu0 0
  %173 = vmatpush1.bf16.msra.mxu0 %v157
  %174 = vmatprep.subr.bf16.mxu0 0
  %175 = vmatpush1.bf16.msra.mxu0 0
  %176 = vmatprep.subr.bf16.mxu0 0
  %177 = vmatpush1.bf16.msra.mxu0 0
  %178 = vmatprep.subr.bf16.mxu0 0
  %179 = vmatpush1.bf16.msra.mxu0 0
  %180 = vmatprep.subr.bf16.mxu0 0
  %181 = vmatpush1.bf16.msra.mxu0 0
  %182 = vmatprep.subr.bf16.mxu0 0
  %183 = vmatpush1.bf16.msra.mxu0 0
  %184 = vmatprep.subr.bf16.mxu0 0
  %185 = vmatpush1.bf16.msra.mxu0 0
  %186 = vmatprep.subr.bf16.mxu0 0
  %187 = vmatpush1.bf16.msra.mxu0 0
  %188 = vmatprep.subr.bf16.mxu0 0
  %189 = vmatpush1.bf16.msra.mxu0 0
  %190 = vmatprep.subr.bf16.mxu0 0
  %191 = vmatpush1.bf16.msra.mxu0 0
  %192 = vmatprep.subr.bf16.mxu0 0
  %193 = vmatpush1.bf16.msra.mxu0 0
  %194 = vmatprep.subr.bf16.mxu0 0
  %195 = vmatpush1.bf16.msra.mxu0 0
  %196 = vmatprep.subr.bf16.mxu0 0
  %197 = vmatpush1.bf16.msra.mxu0 0
  %198 = vmatprep.mubr.bf16.mxu0 0
  %199 = vmatmul.mubr.bf16.gmra.mrb[0].mxu0 %v164
  %v200 = vpop.f32.mrb[0].mxu0
  %v201 = vadd.f32 0.0, %v200
  %v202 = vpop.f32.mrb[0].mxu0
  %v203 = vpop.f32.mrb[0].mxu0
  %v204 = vadd.f32 0.0, %v203
  %v205 = vpop.f32.mrb[0].mxu0
  %206 = vdwg.mxu0
  %v207 = vadd.f32 %v127, %v201
  %v208 = vadd.f32 %v128, %v204
  %209 = vst.msk [vmem:[#allocation2] sm:$0xff] %vm64, %v207
  %210 = vst.msk [vmem:[#allocation2 + $0x8] sm:$0xff] %vm64, %v208
  // Predicated region
  $region34: #{distilbert_forward.14} parent=0 // pred_check
    %p211 = pneg %p27
  $region35: #{distilbert_forward.14} parent=0 // pred_check_branch
    %213 = sbr.rel (%p211) target = $region37
  $region36: #{distilbert_forward.14} parent=0 // pred_region
    %v214 = vld [vmem:[#allocation2] sm:$0xff]
    %v215 = vld [vmem:[#allocation2 + $0x8] sm:$0xff]
    %v216 = vld [vmem:[%s4] sm:$0x1]
    %v218 = vlaneseq
    %v219 = vshrl.u32 %v218, 7
    %v220 = vsub.s32 0, %v219
    %v221 = vrot.slane %v216, %v220
    %v223 = vadd.f32 %v214, %v221
    %v224 = vadd.f32 %v215, %v221
    %v225 = vld [vmem:[%s0] sm:$0xf]
    %v226 = vld [vmem:[%s0 + $0x4] sm:$0xf]
    %v227 = vunpack.c.l.bf16 %v225
    %v228 = vunpack.c.l.bf16 %v226
    %v229 = vadd.f32 %v223, %v227
    %v230 = vadd.f32 %v224, %v228
    %v231 = vsel %vm64, %v229, 0.0
    %232 = vadd.xlane.f32.xlu0 %v231
    %v233 = vpop.xlane.xlu0 %232
    %v234 = vsel %vm64, %v230, 0.0
    %235 = vadd.xlane.f32.xlu0 %v234
    %v236 = vpop.xlane.xlu0 %235
    %v237 = vrcp.pop 32.0
    %v238 = vmul.f32 %v233, %v237
    %v239 = vmul.f32 %v236, %v237
    %v240 = vsub.f32 %v229, %v238
    %v241 = vsub.f32 %v230, %v239
    %v242 = vmul.f32 %v240, %v240
    %v243 = vmul.f32 %v241, %v241
    %v244 = vsel %vm64, %v242, 0.0
    %245 = vadd.xlane.f32.xlu0 %v244
    %v246 = vpop.xlane.xlu0 %245
    %v247 = vsel %vm64, %v243, 0.0
    %248 = vadd.xlane.f32.xlu0 %v247
    %v249 = vpop.xlane.xlu0 %248
    %v250 = vmul.f32 %v246, %v237
    %v251 = vmul.f32 %v249, %v237
    %v252 = vadd.f32 %v250, 1e-12
    %v253 = vadd.f32 %v251, 1e-12
    %v254 = vrsqrt.pop %v252
    %v255 = vrsqrt.pop %v253
    %v256 = vmul.f32 %v240, %v254
    %v257 = vmul.f32 %v241, %v255
    %v258 = vld [vmem:[%s5] sm:$0x1]
    %v260 = vlaneseq
    %v261 = vshrl.u32 %v260, 7
    %v262 = vsub.s32 0, %v261
    %v263 = vrot.slane %v258, %v262
    %v265 = vmul.f32 %v256, %v263
    %v266 = vmul.f32 %v257, %v263
    %v267 = vld [vmem:[%s6] sm:$0x1]
    %v269 = vlaneseq
    %v270 = vshrl.u32 %v269, 7
    %v271 = vsub.s32 0, %v270
    %v272 = vrot.slane %v267, %v271
    %v274 = vadd.f32 %v265, %v272
    %v275 = vadd.f32 %v266, %v272
    %v276 = vpack.c.bf16 %v275, %v274
    %v278 = vunpack.c.l.b16 %v276
    %v279 = vunpack.c.h.b16 %v276
    %v280 = vpack.c.b16 %v278, %v278
    %v281 = vpack.c.b16 %v279, %v279
    %vm284 = vcmask 257024
    %285 = vst.msk [vmem:[%s7] sm:$0xf] %vm284, %v280
    %286 = vst.msk [vmem:[%s7 + $0x4] sm:$0xf] %vm284, %v281
  $region37: #{distilbert_forward.14} parent=0 // pred_fallthru
    _
  // Predicated region
  $region38: #{distilbert_forward.14} parent=0 // pred_check
    _
  $region39: #{distilbert_forward.14} parent=0 // pred_check_branch
    %288 = sbr.rel (0) target = $region41
  $region40: #{distilbert_forward.14} parent=0 // pred_region
    _
  $region41: #{distilbert_forward.14} parent=0 // pred_fallthru
    _
  // Predicated region
  $region42: #{distilbert_forward.14} parent=0 // pred_check
    _
  $region43: #{distilbert_forward.14} parent=0 // pred_check_branch
    %290 = sbr.rel (0) target = $region45
  $region44: #{distilbert_forward.14} parent=0 // pred_region
    _
  $region45: #{distilbert_forward.14} parent=0 // pred_fallthru
    _

// kernel: distilbert_forward.19
$region0: #{distilbert_forward.19}
  #allocation0 [shape = 'u32[]', space=smem, size = 0x4, offset = 0x4, fixed_abs, tag = 'smem constant byte address 0x4 - core index']
  #allocation1 [shape = 'u32[144,128]{1,0:T(1,128)}', space=vmem, size = 0x12000, scoped, tag = 'internal scratch']
  #allocation2 [shape = 'f32[2,128]{1,0:T(2,128)}', space=vmem, size = 0x400, scoped, tag = 'scratch operand']
  %s0 = inlined_call_operand.vmem [shape: bf16[2,32], index: 0, kind: input, shape index: {}]
  %s1 = inlined_call_operand.vmem [shape: bf16[32,128], index: 1, kind: input, shape index: {}]
  %s2 = inlined_call_operand.vmem [shape: f32[1,128], index: 2, kind: input, shape index: {}]
  %s3 = inlined_call_operand.hbm [shape: f32[2,128], index: 3, kind: output, shape index: {}]
  %s4 = sld [smem:[#allocation0]]
  $region30: #{distilbert_forward.19} parent=0
    _
  %s6 = ssub.s32 1, %s4
  %s7 = scalar_select 0, %s6, %s4
  $region1: #{distilbert_forward.19} parent=0
    #allocation3 [shape = 'u8[1024]{0}', space=vmem, size = 0x400, scoped, tag = 'output window, operand 0, single buffered']
    #allocation4 [shape = 's32[1]{0}', space=sflag, size = 0x4, scoped, tag = 'scoped memory for distilbert_forward.19']
    %8 = vsyncpa [#allocation4], 0
    // Predicated region
    $region2: #{distilbert_forward.19} parent=1 // pred_check
      _
    $region3: #{distilbert_forward.19} parent=1 // pred_check_branch
      %10 = sbr.rel (0) target = $region5
    $region4: #{distilbert_forward.19} parent=1 // pred_region
      _
    $region5: #{distilbert_forward.19} parent=1 // pred_fallthru
      _
    // Predicated region
    $region6: #{distilbert_forward.19} parent=1 // pred_check
      _
    $region7: #{distilbert_forward.19} parent=1 // pred_check_branch
      %12 = sbr.rel (0) target = $region9
    $region8: #{distilbert_forward.19} parent=1 // pred_region
      _
    $region9: #{distilbert_forward.19} parent=1 // pred_fallthru
      _
    // Predicated region
    $region10: #{distilbert_forward.19} parent=1 // pred_check
      _
    $region11: #{distilbert_forward.19} parent=1 // pred_check_branch
      %14 = sbr.rel (0) target = $region13
    $region12: #{distilbert_forward.19} parent=1 // pred_region
      _
    $region13: #{distilbert_forward.19} parent=1 // pred_fallthru
      _
    %p16 = scmp.eq.s32.totalorder 0, 0
    // Predicated region
    $region14: #{distilbert_forward.19} parent=1 // pred_check
      %p17 = pneg %p16
    $region15: #{distilbert_forward.19} parent=1 // pred_check_branch
      %19 = sbr.rel (%p17) target = $region17
    $region16: #{distilbert_forward.19} parent=1 // pred_region
      %20 = vst [vmem:[#allocation2] sm:$0x3] 0.0
    $region17: #{distilbert_forward.19} parent=1 // pred_fallthru
      _
    %v21 = vld [vmem:[#allocation2] sm:$0x3]
    %v22 = vld [vmem:[%s0] sm:$0x1]
    %v23 = vld [vmem:[%s1] sm:$0xf]
    %v24 = vld [vmem:[%s1 + $0x4] sm:$0xf]
    %v25 = vld [vmem:[%s1 + $0x8] sm:$0xf]
    %v26 = vld [vmem:[%s1 + $0xc] sm:$0xf]
    %v31 = vunpack.c.l.b16 %v23
    %v32 = vunpack.c.l.b16 %v24
    %v33 = vunpack.c.l.b16 %v25
    %v34 = vunpack.c.l.b16 %v26
    %v35 = vpack.c.b16 %v32, %v31
    %v36 = vpack.c.b16 %v34, %v33
    %vm39 = vcmask 261120
    %v41 = vsel %vm39, %v22, 0
    %43 = vmatprep.subr.bf16.mxu0 0
    %44 = vmatpush1.bf16.msra.mxu0 %v35
    %45 = vmatprep.subr.bf16.mxu0 0
    %46 = vmatpush1.bf16.msra.mxu0 %v36
    %47 = vmatprep.subr.bf16.mxu0 0
    %48 = vmatpush1.bf16.msra.mxu0 0
    %49 = vmatprep.subr.bf16.mxu0 0
    %50 = vmatpush1.bf16.msra.mxu0 0
    %51 = vmatprep.subr.bf16.mxu0 0
    %52 = vmatpush1.bf16.msra.mxu0 0
    %53 = vmatprep.subr.bf16.mxu0 0
    %54 = vmatpush1.bf16.msra.mxu0 0
    %55 = vmatprep.subr.bf16.mxu0 0
    %56 = vmatpush1.bf16.msra.mxu0 0
    %57 = vmatprep.subr.bf16.mxu0 0
    %58 = vmatpush1.bf16.msra.mxu0 0
    %59 = vmatprep.subr.bf16.mxu0 0
    %60 = vmatpush1.bf16.msra.mxu0 0
    %61 = vmatprep.subr.bf16.mxu0 0
    %62 = vmatpush1.bf16.msra.mxu0 0
    %63 = vmatprep.subr.bf16.mxu0 0
    %64 = vmatpush1.bf16.msra.mxu0 0
    %65 = vmatprep.subr.bf16.mxu0 0
    %66 = vmatpush1.bf16.msra.mxu0 0
    %67 = vmatprep.subr.bf16.mxu0 0
    %68 = vmatpush1.bf16.msra.mxu0 0
    %69 = vmatprep.subr.bf16.mxu0 0
    %70 = vmatpush1.bf16.msra.mxu0 0
    %71 = vmatprep.subr.bf16.mxu0 0
    %72 = vmatpush1.bf16.msra.mxu0 0
    %73 = vmatprep.subr.bf16.mxu0 0
    %74 = vmatpush1.bf16.msra.mxu0 0
    %75 = vmatprep.mubr.bf16.mxu0 0
    %76 = vmatmul.mubr.bf16.gmra.mrb[0].mxu0 %v41
    %v77 = vpop.f32.mrb[0].mxu0
    %v78 = vadd.f32 0.0, %v77
    %v79 = vpop.f32.mrb[0].mxu0
    %v80 = vpop.f32.mrb[0].mxu0
    %v81 = vpop.f32.mrb[0].mxu0
    %82 = vdwg.mxu0
    %v83 = vadd.f32 %v21, %v78
    %84 = vst [vmem:[#allocation2] sm:$0x3] %v83
    // Predicated region
    $region18: #{distilbert_forward.19} parent=1 // pred_check
      %p85 = pneg %p16
    $region19: #{distilbert_forward.19} parent=1 // pred_check_branch
      %87 = sbr.rel (%p85) target = $region21
    $region20: #{distilbert_forward.19} parent=1 // pred_region
      %v88 = vld [vmem:[#allocation2] sm:$0x3]
      %v89 = vld [vmem:[%s2] sm:$0x1]
      %v91 = vlaneseq
      %v92 = vshrl.u32 %v91, 7
      %v93 = vsub.s32 0, %v92
      %v94 = vrot.slane %v89, %v93
      %v96 = vadd.f32 %v88, %v94
      %v97 = vxor.u32 %v96, 2147483648
      %v98 = vmul.f32 %v97, 1.442695
      %v99 = vpow.pop %v98
      %v100 = vadd.f32 %v99, 1.0
      %v101 = vrcp.pop %v100
      %v102 = vmul.f32 1.0, %v101
      %103 = vst [vmem:[#allocation3] sm:$0x3] %v102
    $region21: #{distilbert_forward.19} parent=1 // pred_fallthru
      _
    // Predicated region
    $region22: #{distilbert_forward.19} parent=1 // pred_check
      _
    $region23: #{distilbert_forward.19} parent=1 // pred_check_branch
      %105 = sbr.rel (0) target = $region25
    $region24: #{distilbert_forward.19} parent=1 // pred_region
      %s107 = ssub.s32 32, 32
      %108 = vsyncadd [#allocation4], %s107
      %s110 = sshll.u32 [#allocation3], 4
      %s111 = int_to_ptr.vmem [resolvable:$true] %s110
      %113 = dma.vmem_to_hbm [thread:$0]  %s111, 32, %s3, [#allocation4]
    $region25: #{distilbert_forward.19} parent=1 // pred_fallthru
      _
    // Predicated region
    $region26: #{distilbert_forward.19} parent=1 // pred_check
      _
    $region27: #{distilbert_forward.19} parent=1 // pred_check_branch
      %115 = sbr.rel (0) target = $region29
    $region28: #{distilbert_forward.19} parent=1 // pred_region
      %116 = dma.done [#allocation4], 32
    $region29: #{distilbert_forward.19} parent=1 // pred_fallthru
      _
    %117 = vsyncpa [#allocation4], 1

</llo_original>
